<compile_context>
chip_gen: v5e
topology: v5e:2x2
jax: 0.10.0
libtpu: 0.0.40
codegen_flags: <defaults>
</compile_context>

<pallas_src>
import functools

import jax
import jax.numpy as jnp
from jax.experimental import pallas as pl
from jax.experimental.pallas import tpu as pltpu

EPS = 1e-5
GROUP_SIZE = 32  # GroupNorm2d(dim, 32): groups of 32 consecutive channels

_PARAM_KEYS = ("w_dw", "b_dw", "norm_w", "norm_b", "W1", "b1",
               "grn_w", "grn_b", "W2", "b2", "sg", "bg")


# ---------------------------------------------------------------------------
# parameter prep (hoisted: run once per parameter set, not per forward call)
# ---------------------------------------------------------------------------
def se_gn_prepare(params):
    """Precompute kernel-ready tensors (all f32, 2-D, column-oriented)."""
    f32 = jnp.float32
    C = params["W1"].shape[1]
    assert C % GROUP_SIZE == 0
    G = C // GROUP_SIZE

    def col(a):
        return jnp.asarray(a, f32).reshape(-1, 1)

    def expand(a):  # per-group (G,) affine -> per-channel column (C, 1)
        return jnp.repeat(jnp.asarray(a, f32), GROUP_SIZE).reshape(C, 1)

    gid = jnp.arange(C) // GROUP_SIZE
    sg = (jnp.arange(G)[:, None] == gid[None, :]).astype(f32) / GROUP_SIZE  # (G, C) avg
    bg = (gid[:, None] == jnp.arange(G)[None, :]).astype(f32)               # (C, G) bcast
    return {
        "w_dw": col(params["w_dw"]), "b_dw": col(params["b_dw"]),
        "norm_w": expand(params["norm_w"]), "norm_b": expand(params["norm_b"]),
        "W1": jnp.asarray(params["W1"], f32), "b1": col(params["b1"]),
        "grn_w": expand(params["grn_w"]), "grn_b": expand(params["grn_b"]),
        "W2": jnp.asarray(params["W2"], f32), "b2": col(params["b2"]),
        "sg": sg, "bg": bg,
    }


def _vmem_budget():
    """~70% of this generation's physical VMEM (fallback: v7x's 64 MiB per core)."""
    cap = 64 << 20
    try:
        info = pltpu.get_tpu_info()
        cap = int(getattr(info, "vmem_capacity_bytes", cap) or cap)
    except Exception:
        pass
    return max(16 << 20, int(cap * 0.7))


# ---------------------------------------------------------------------------
# excitation MLP in column orientation: p is (C, M) f32, channels on sublanes
# ---------------------------------------------------------------------------
def _excite_columns(p, w_dw, b_dw, nw, nb_, w1, b1, gw, gb, w2, b2, sg, bg):
    def gn(v, w, b):
        mu = jnp.dot(bg, jnp.dot(sg, v, preferred_element_type=jnp.float32),
                     preferred_element_type=jnp.float32)
        d = v - mu
        var = jnp.dot(bg, jnp.dot(sg, d * d, preferred_element_type=jnp.float32),
                      preferred_element_type=jnp.float32)
        return d * jax.lax.rsqrt(var + EPS) * w + b

    v = p * w_dw + b_dw                                             # depthwise 1x1
    v = gn(v, nw, nb_)                                              # GroupNorm #1
    v = jnp.dot(w1, v, preferred_element_type=jnp.float32) + b1     # pwconv1
    v = jnp.maximum(v, 0.0)                                         # ReLU
    v = gn(v, gw, gb)                                               # GroupNorm #2
    v = jnp.dot(w2, v, preferred_element_type=jnp.float32) + b2     # pwconv2
    return v                                                        # (Cout, M)


# ---------------------------------------------------------------------------
# FUSED kernel: single HBM read of x, pool + excite + residual in one step
# ---------------------------------------------------------------------------
def _fused_kernel(x_ref, w_dw, b_dw, nw, nb_, w1, b1, gw, gb, w2, b2, sg, bg,
                  o_ref, *, inv_hw):
    x = x_ref[...]                                                  # (C, HW), native dtype
    p = jnp.sum(x.astype(jnp.float32), axis=-1, keepdims=True) * inv_hw   # (C, 1)
    v = _excite_columns(p, w_dw[...], b_dw[...], nw[...], nb_[...], w1[...], b1[...],
                        gw[...], gb[...], w2[...], b2[...], sg[...], bg[...])
    o_ref[...] = (x + v.astype(x.dtype)).astype(o_ref.dtype)        # lane broadcast add


# ---------------------------------------------------------------------------
# STREAMING kernels: pool+excite (lane-wise VALU accumulation), then residual
# ---------------------------------------------------------------------------
def _pool_excite_kernel(x_ref, w_dw, b_dw, nw, nb_, w1, b1, gw, gb, w2, b2, sg, bg,
                        v_ref, acc_ref, *, inv_hw, hw_total, hw_tile, chunk):
    h = pl.program_id(1)

    @pl.when(h == 0)
    def _():
        acc_ref[...] = jnp.zeros_like(acc_ref)

    x = x_ref[...]                                                  # (C, hw_tile)
    if hw_total % hw_tile != 0:
        # cdiv-tiled tail: mask out-of-range lanes of the (padded) last block
        lane = jax.lax.broadcasted_iota(jnp.int32, x.shape, 1)
        x = jnp.where(h * hw_tile + lane < hw_total, x, jnp.zeros_like(x))

    # lane-wise (VALU) accumulation in 128-wide chunks; keeps the big reduce off the XLU
    part = x[:, 0:chunk].astype(jnp.float32)
    for k in range(1, hw_tile // chunk):
        part = part + x[:, k * chunk:(k + 1) * chunk].astype(jnp.float32)
    acc_ref[...] += part

    @pl.when(h == pl.num_programs(1) - 1)
    def _():
        p = jnp.sum(acc_ref[...], axis=-1, keepdims=True) * inv_hw  # (C, 1), tiny XLU reduce
        v = _excite_columns(p, w_dw[...], b_dw[...], nw[...], nb_[...], w1[...],
                            b1[...], gw[...], gb[...], w2[...], b2[...],
                            sg[...], bg[...])
        v_ref[...] = v.astype(v_ref.dtype)


def _residual_kernel(x_ref, v_ref, o_ref):
    x = x_ref[...]                                                  # (C, hw_tile)
    o_ref[...] = (x + v_ref[...].astype(x.dtype)).astype(o_ref.dtype)


# ---------------------------------------------------------------------------
# wrapper
# ---------------------------------------------------------------------------
def se_gn_forward(x_nchw, params, *, target_block_bytes=None, force_streaming=False,
                  donate_input=False):
    if "sg" not in params:                 # accept raw (PyTorch-style) params too
        params = se_gn_prepare(params)

    N, C, H, W = x_nchw.shape
    Cout = params["W2"].shape[0]
    assert Cout == C, "residual add requires outdim == dim"
    assert C % GROUP_SIZE == 0, "dim must be divisible by 32 (GroupNorm2d(dim, 32))"
    HW = H * W
    x3 = x_nchw.reshape(N, C, HW)          # free reshape (no transpose), dtype preserved
    itemsize = x3.dtype.itemsize
    inv_hw = 1.0 / HW

    plist = [params[k] for k in _PARAM_KEYS]
    params_vmem = 2 * sum(int(p.size) * p.dtype.itemsize for p in plist)
    # TODO(synk): for very large C (>~1024) the resident (C,C) excitation weights should
    # be streamed/tiled; current design keeps them fully VMEM-resident.

    budget = _vmem_budget()
    if target_block_bytes is None:
        # v5e/v6e (128 MiB VMEM) -> bigger tiles; v7x (64 MiB) -> smaller
        target_block_bytes = (6 << 20) if budget >= (64 << 20) else (3 << 20)

    slab = C * HW * itemsize
    fused_need = 6 * slab + params_vmem + (4 << 20)   # blocks + in-kernel temporaries
    use_fused = (not force_streaming) and fused_need <= budget

    # ---- fused single-read path ---------------------------------------------
    if use_fused:
        # TODO(synk): batch several tiny samples per grid step (nb>1) for the
        # large-N / tiny-HW regime; currently one sample per step.
        out = pl.pallas_call(
            functools.partial(_fused_kernel, inv_hw=inv_hw),
            out_shape=jax.ShapeDtypeStruct((N, C, HW), x3.dtype),
            grid_spec=pltpu.PrefetchScalarGridSpec(
                num_scalar_prefetch=0,
                grid=(N,),
                in_specs=[pl.BlockSpec((None, C, HW), lambda n: (n, 0, 0))]
                         + [pl.BlockSpec(p.shape, lambda n: (0, 0)) for p in plist],
                out_specs=pl.BlockSpec((None, C, HW), lambda n: (n, 0, 0)),
            ),
            compiler_params=pltpu.CompilerParams(
                dimension_semantics=("parallel",),
                vmem_limit_bytes=min(max(fused_need, 16 << 20), budget),
            ),
            input_output_aliases=({0: 0} if donate_input else {}),
        )(x3, *plist)
        return out.reshape(N, C, H, W)

    # ---- streaming fallback: pool+excite, then residual ----------------------
    if HW >= 128:
        lanes = max(128, (target_block_bytes // (C * itemsize)) // 128 * 128)
        hw_tile = int(min(lanes, (HW // 128) * 128))   # multiple of 128, <= HW
        chunk = 128
    else:
        hw_tile = HW
        chunk = HW
    num_h = pl.cdiv(HW, hw_tile)
    x_blk = C * hw_tile * itemsize

    # TODO(synk): for N == 1 on v7x the pool sweep runs on one core; an outer parallel
    # HW split with a tiny partial-sum combine would use both TensorCores.
    pool_need = int(1.5 * (2 * x_blk + params_vmem + C * chunk * 4)) + (2 << 20)
    v = pl.pallas_call(
        functools.partial(_pool_excite_kernel, inv_hw=inv_hw, hw_total=HW,
                          hw_tile=hw_tile, chunk=chunk),
        out_shape=jax.ShapeDtypeStruct((N, C, 1), jnp.float32),
        grid_spec=pltpu.PrefetchScalarGridSpec(
            num_scalar_prefetch=0,
            grid=(N, num_h),
            in_specs=[pl.BlockSpec((None, C, hw_tile), lambda n, h: (n, 0, h))]
                     + [pl.BlockSpec(p.shape, lambda n, h: (0, 0)) for p in plist],
            out_specs=pl.BlockSpec((None, C, 1), lambda n, h: (n, 0, 0)),
            scratch_shapes=[pltpu.VMEM((C, chunk), jnp.float32)],
        ),
        compiler_params=pltpu.CompilerParams(
            dimension_semantics=("parallel", "arbitrary"),
            vmem_limit_bytes=min(max(pool_need, 16 << 20), budget),
        ),
    )(x3, *plist)

    res_need = int(1.5 * 4 * x_blk) + (2 << 20)
    out = pl.pallas_call(
        _residual_kernel,
        out_shape=jax.ShapeDtypeStruct((N, C, HW), x3.dtype),
        grid_spec=pltpu.PrefetchScalarGridSpec(
            num_scalar_prefetch=0,
            grid=(N, num_h),
            in_specs=[pl.BlockSpec((None, C, hw_tile), lambda n, h: (n, 0, h)),
                      pl.BlockSpec((None, C, 1), lambda n, h: (n, 0, 0))],
            out_specs=pl.BlockSpec((None, C, hw_tile), lambda n, h: (n, 0, h)),
        ),
        compiler_params=pltpu.CompilerParams(
            dimension_semantics=("parallel", "parallel"),
            vmem_limit_bytes=min(max(res_need, 16 << 20), budget),
        ),
        input_output_aliases=({0: 0} if donate_input else {}),
    )(x3, v)
    return out.reshape(N, C, H, W)


# ---------------------------------------------------------------------------
# pure-JAX reference (mirror of the PyTorch forward) for verification
# ---------------------------------------------------------------------------
def se_gn_reference(x_nchw, params):
    N, C, H, W = x_nchw.shape
    G = C // GROUP_SIZE
    v = jnp.mean(x_nchw.astype(jnp.float32), axis=(2, 3))           # avg_pool -> (N, C)
    v = v * params["w_dw"] + params["b_dw"]                         # dwconv 1x1, groups=C

    def gn(v, w, b):
        vg = v.reshape(N, G, GROUP_SIZE)
        mu = vg.mean(-1, keepdims=True)
        var = ((vg - mu) ** 2).mean(-1, keepdims=True)              # biased variance
        vg = (vg - mu) / jnp.sqrt(var + EPS)
        vg = vg * w[None, :, None] + b[None, :, None]               # per-group affine
        return vg.reshape(N, C)

    v = gn(v, params["norm_w"], params["norm_b"])
    v = v @ params["W1"].T + params["b1"]
    v = jnp.maximum(v, 0.0)
    v = gn(v, params["grn_w"], params["grn_b"])
    v = v @ params["W2"].T + params["b2"]
    return x_nchw + v[:, :, None, None].astype(x_nchw.dtype)


if __name__ == "__main__":
    N, C, H, W = 2, 64, 16, 16       # dim = outdim = 64 (divisible by 32); HW = 256
    G = C // GROUP_SIZE

    key = jax.random.PRNGKey(0)
    ks = jax.random.split(key, 12)
    params = {
        "w_dw":   jax.random.normal(ks[0], (C,), jnp.float32) * 0.5,   # dwconv (C,1,1,1)->(C,)
        "b_dw":   jax.random.normal(ks[1], (C,), jnp.float32) * 0.1,
        "norm_w": jax.random.normal(ks[2], (G,), jnp.float32) * 0.5 + 1.0,
        "norm_b": jax.random.normal(ks[3], (G,), jnp.float32) * 0.1,
        "W1":     jax.random.normal(ks[4], (C, C), jnp.float32) * 0.1,  # pwconv1 (out, in)
        "b1":     jax.random.normal(ks[5], (C,), jnp.float32) * 0.1,
        "grn_w":  jax.random.normal(ks[6], (G,), jnp.float32) * 0.5 + 1.0,
        "grn_b":  jax.random.normal(ks[7], (G,), jnp.float32) * 0.1,
        "W2":     jax.random.normal(ks[8], (C, C), jnp.float32) * 0.1,  # pwconv2 (out, in)
        "b2":     jax.random.normal(ks[9], (C,), jnp.float32) * 0.1,
    }
    prepped = se_gn_prepare(params)   # hoisted once-per-module parameter prep

    # 1) fused single-read path (small per-sample slab)
    x = jax.random.normal(ks[10], (N, C, H, W), jnp.float32)
    out = jax.block_until_ready(se_gn_forward(x, prepped))
    ref = se_gn_reference(x, params)
    assert out.shape == x.shape and out.dtype == x.dtype
    assert jnp.allclose(out, ref, atol=1e-3, rtol=1e-3), "fused path mismatch"

    # 2) streaming fallback path with a non-128-divisible HW (exercises tail masking)
    Hs, Ws = 13, 13
    x2 = jax.random.normal(ks[11], (N, C, Hs, Ws), jnp.float32)
    out2 = jax.block_until_ready(
        se_gn_forward(x2, prepped, force_streaming=True, target_block_bytes=64 << 10))
    ref2 = se_gn_reference(x2, params)
    assert out2.shape == x2.shape and out2.dtype == x2.dtype
    assert jnp.allclose(out2, ref2, atol=1e-3, rtol=1e-3), "streaming path mismatch"

    print("KERNEL_OK")
</pallas_src>

<mosaic_0001>
module attributes {stable_mosaic.version = 11 : i64} {
  func.func @_fused_kernel(%arg0: i32, %arg1: memref<1x64x256xf32, #tpu.memory_space<vmem>>, %arg2: memref<64x1xf32, #tpu.memory_space<vmem>>, %arg3: memref<64x1xf32, #tpu.memory_space<vmem>>, %arg4: memref<64x1xf32, #tpu.memory_space<vmem>>, %arg5: memref<64x1xf32, #tpu.memory_space<vmem>>, %arg6: memref<64x64xf32, #tpu.memory_space<vmem>>, %arg7: memref<64x1xf32, #tpu.memory_space<vmem>>, %arg8: memref<64x1xf32, #tpu.memory_space<vmem>>, %arg9: memref<64x1xf32, #tpu.memory_space<vmem>>, %arg10: memref<64x64xf32, #tpu.memory_space<vmem>>, %arg11: memref<64x1xf32, #tpu.memory_space<vmem>>, %arg12: memref<2x64xf32, #tpu.memory_space<vmem>>, %arg13: memref<64x2xf32, #tpu.memory_space<vmem>>, %arg14: memref<1x64x256xf32, #tpu.memory_space<vmem>>) attributes {dimension_semantics = [#tpu.dimension_semantics<parallel>], iteration_bounds = array<i64: 2>, scalar_prefetch = 0 : i64, scratch_operands = 0 : i64, tpu.core_type = #tpu.core_type<tc>, window_params = [{transform_indices = @transform_0, window_bounds = array<i64: 1, 64, 256>}, {pipeline_mode = #tpu.pipeline_mode<synchronous>, transform_indices = @transform_1, window_bounds = array<i64: 64, 1>}, {pipeline_mode = #tpu.pipeline_mode<synchronous>, transform_indices = @transform_2, window_bounds = array<i64: 64, 1>}, {pipeline_mode = #tpu.pipeline_mode<synchronous>, transform_indices = @transform_3, window_bounds = array<i64: 64, 1>}, {pipeline_mode = #tpu.pipeline_mode<synchronous>, transform_indices = @transform_4, window_bounds = array<i64: 64, 1>}, {pipeline_mode = #tpu.pipeline_mode<synchronous>, transform_indices = @transform_5, window_bounds = array<i64: 64, 64>}, {pipeline_mode = #tpu.pipeline_mode<synchronous>, transform_indices = @transform_6, window_bounds = array<i64: 64, 1>}, {pipeline_mode = #tpu.pipeline_mode<synchronous>, transform_indices = @transform_7, window_bounds = array<i64: 64, 1>}, {pipeline_mode = #tpu.pipeline_mode<synchronous>, transform_indices = @transform_8, window_bounds = array<i64: 64, 1>}, {pipeline_mode = #tpu.pipeline_mode<synchronous>, transform_indices = @transform_9, window_bounds = array<i64: 64, 64>}, {pipeline_mode = #tpu.pipeline_mode<synchronous>, transform_indices = @transform_10, window_bounds = array<i64: 64, 1>}, {pipeline_mode = #tpu.pipeline_mode<synchronous>, transform_indices = @transform_11, window_bounds = array<i64: 2, 64>}, {pipeline_mode = #tpu.pipeline_mode<synchronous>, transform_indices = @transform_12, window_bounds = array<i64: 64, 2>}, {transform_indices = @transform_13, window_bounds = array<i64: 1, 64, 256>}]} {
    %c0 = arith.constant 0 : index
    %c0_0 = arith.constant 0 : index
    %c0_1 = arith.constant 0 : index
    %0 = vector.load %arg1[%c0, %c0_0, %c0_1] : memref<1x64x256xf32, #tpu.memory_space<vmem>>, vector<1x64x256xf32>
    %1 = vector.shape_cast %0 : vector<1x64x256xf32> to vector<64x256xf32>
    %cst = arith.constant dense<0.000000e+00> : vector<64xf32>
    %2 = vector.multi_reduction <add>, %1, %cst [1] : vector<64x256xf32> to vector<64xf32>
    %3 = vector.shape_cast %2 : vector<64xf32> to vector<64x1xf32>
    %cst_2 = arith.constant 3.906250e-03 : f32
    %4 = vector.broadcast %cst_2 : f32 to vector<64x1xf32>
    %5 = arith.mulf %3, %4 : vector<64x1xf32>
    %c0_3 = arith.constant 0 : index
    %c0_4 = arith.constant 0 : index
    %6 = vector.load %arg2[%c0_3, %c0_4] : memref<64x1xf32, #tpu.memory_space<vmem>>, vector<64x1xf32>
    %c0_5 = arith.constant 0 : index
    %c0_6 = arith.constant 0 : index
    %7 = vector.load %arg3[%c0_5, %c0_6] : memref<64x1xf32, #tpu.memory_space<vmem>>, vector<64x1xf32>
    %c0_7 = arith.constant 0 : index
    %c0_8 = arith.constant 0 : index
    %8 = vector.load %arg4[%c0_7, %c0_8] : memref<64x1xf32, #tpu.memory_space<vmem>>, vector<64x1xf32>
    %c0_9 = arith.constant 0 : index
    %c0_10 = arith.constant 0 : index
    %9 = vector.load %arg5[%c0_9, %c0_10] : memref<64x1xf32, #tpu.memory_space<vmem>>, vector<64x1xf32>
    %c0_11 = arith.constant 0 : index
    %c0_12 = arith.constant 0 : index
    %10 = vector.load %arg6[%c0_11, %c0_12] : memref<64x64xf32, #tpu.memory_space<vmem>>, vector<64x64xf32>
    %c0_13 = arith.constant 0 : index
    %c0_14 = arith.constant 0 : index
    %11 = vector.load %arg7[%c0_13, %c0_14] : memref<64x1xf32, #tpu.memory_space<vmem>>, vector<64x1xf32>
    %c0_15 = arith.constant 0 : index
    %c0_16 = arith.constant 0 : index
    %12 = vector.load %arg8[%c0_15, %c0_16] : memref<64x1xf32, #tpu.memory_space<vmem>>, vector<64x1xf32>
    %c0_17 = arith.constant 0 : index
    %c0_18 = arith.constant 0 : index
    %13 = vector.load %arg9[%c0_17, %c0_18] : memref<64x1xf32, #tpu.memory_space<vmem>>, vector<64x1xf32>
    %c0_19 = arith.constant 0 : index
    %c0_20 = arith.constant 0 : index
    %14 = vector.load %arg10[%c0_19, %c0_20] : memref<64x64xf32, #tpu.memory_space<vmem>>, vector<64x64xf32>
    %c0_21 = arith.constant 0 : index
    %c0_22 = arith.constant 0 : index
    %15 = vector.load %arg11[%c0_21, %c0_22] : memref<64x1xf32, #tpu.memory_space<vmem>>, vector<64x1xf32>
    %c0_23 = arith.constant 0 : index
    %c0_24 = arith.constant 0 : index
    %16 = vector.load %arg12[%c0_23, %c0_24] : memref<2x64xf32, #tpu.memory_space<vmem>>, vector<2x64xf32>
    %c0_25 = arith.constant 0 : index
    %c0_26 = arith.constant 0 : index
    %17 = vector.load %arg13[%c0_25, %c0_26] : memref<64x2xf32, #tpu.memory_space<vmem>>, vector<64x2xf32>
    %18 = arith.mulf %5, %6 : vector<64x1xf32>
    %19 = arith.addf %18, %7 : vector<64x1xf32>
    %cst_27 = arith.constant dense<0.000000e+00> : vector<2x1xf32>
    %20 = tpu.matmul %16, %19, %cst_27 {dimension_numbers = #tpu.dot_dimension_numbers<[1], [0], [0], [1], [0, 0, 1, 1], [], []>} : vector<2x64xf32>, vector<64x1xf32>, vector<2x1xf32> -> vector<2x1xf32>
    %cst_28 = arith.constant dense<0.000000e+00> : vector<64x1xf32>
    %21 = tpu.matmul %17, %20, %cst_28 {dimension_numbers = #tpu.dot_dimension_numbers<[1], [0], [0], [1], [0, 0, 1, 1], [], []>} : vector<64x2xf32>, vector<2x1xf32>, vector<64x1xf32> -> vector<64x1xf32>
    %22 = arith.subf %19, %21 : vector<64x1xf32>
    %23 = arith.mulf %22, %22 : vector<64x1xf32>
    %cst_29 = arith.constant dense<0.000000e+00> : vector<2x1xf32>
    %24 = tpu.matmul %16, %23, %cst_29 {dimension_numbers = #tpu.dot_dimension_numbers<[1], [0], [0], [1], [0, 0, 1, 1], [], []>} : vector<2x64xf32>, vector<64x1xf32>, vector<2x1xf32> -> vector<2x1xf32>
    %cst_30 = arith.constant dense<0.000000e+00> : vector<64x1xf32>
    %25 = tpu.matmul %17, %24, %cst_30 {dimension_numbers = #tpu.dot_dimension_numbers<[1], [0], [0], [1], [0, 0, 1, 1], [], []>} : vector<64x2xf32>, vector<2x1xf32>, vector<64x1xf32> -> vector<64x1xf32>
    %cst_31 = arith.constant 9.99999974E-6 : f32
    %26 = vector.broadcast %cst_31 : f32 to vector<64x1xf32>
    %27 = arith.addf %25, %26 : vector<64x1xf32>
    %28 = math.rsqrt %27 : vector<64x1xf32>
    %29 = arith.mulf %22, %28 : vector<64x1xf32>
    %30 = arith.mulf %29, %8 : vector<64x1xf32>
    %31 = arith.addf %30, %9 : vector<64x1xf32>
    %cst_32 = arith.constant dense<0.000000e+00> : vector<64x1xf32>
    %32 = tpu.matmul %10, %31, %cst_32 {dimension_numbers = #tpu.dot_dimension_numbers<[1], [0], [0], [1], [0, 0, 1, 1], [], []>} : vector<64x64xf32>, vector<64x1xf32>, vector<64x1xf32> -> vector<64x1xf32>
    %33 = arith.addf %32, %11 : vector<64x1xf32>
    %cst_33 = arith.constant 0.000000e+00 : f32
    %34 = vector.broadcast %cst_33 : f32 to vector<64x1xf32>
    %35 = arith.maximumf %33, %34 : vector<64x1xf32>
    %cst_34 = arith.constant dense<0.000000e+00> : vector<2x1xf32>
    %36 = tpu.matmul %16, %35, %cst_34 {dimension_numbers = #tpu.dot_dimension_numbers<[1], [0], [0], [1], [0, 0, 1, 1], [], []>} : vector<2x64xf32>, vector<64x1xf32>, vector<2x1xf32> -> vector<2x1xf32>
    %cst_35 = arith.constant dense<0.000000e+00> : vector<64x1xf32>
    %37 = tpu.matmul %17, %36, %cst_35 {dimension_numbers = #tpu.dot_dimension_numbers<[1], [0], [0], [1], [0, 0, 1, 1], [], []>} : vector<64x2xf32>, vector<2x1xf32>, vector<64x1xf32> -> vector<64x1xf32>
    %38 = arith.subf %35, %37 : vector<64x1xf32>
    %39 = arith.mulf %38, %38 : vector<64x1xf32>
    %cst_36 = arith.constant dense<0.000000e+00> : vector<2x1xf32>
    %40 = tpu.matmul %16, %39, %cst_36 {dimension_numbers = #tpu.dot_dimension_numbers<[1], [0], [0], [1], [0, 0, 1, 1], [], []>} : vector<2x64xf32>, vector<64x1xf32>, vector<2x1xf32> -> vector<2x1xf32>
    %cst_37 = arith.constant dense<0.000000e+00> : vector<64x1xf32>
    %41 = tpu.matmul %17, %40, %cst_37 {dimension_numbers = #tpu.dot_dimension_numbers<[1], [0], [0], [1], [0, 0, 1, 1], [], []>} : vector<64x2xf32>, vector<2x1xf32>, vector<64x1xf32> -> vector<64x1xf32>
    %cst_38 = arith.constant 9.99999974E-6 : f32
    %42 = vector.broadcast %cst_38 : f32 to vector<64x1xf32>
    %43 = arith.addf %41, %42 : vector<64x1xf32>
    %44 = math.rsqrt %43 : vector<64x1xf32>
    %45 = arith.mulf %38, %44 : vector<64x1xf32>
    %46 = arith.mulf %45, %12 : vector<64x1xf32>
    %47 = arith.addf %46, %13 : vector<64x1xf32>
    %cst_39 = arith.constant dense<0.000000e+00> : vector<64x1xf32>
    %48 = tpu.matmul %14, %47, %cst_39 {dimension_numbers = #tpu.dot_dimension_numbers<[1], [0], [0], [1], [0, 0, 1, 1], [], []>} : vector<64x64xf32>, vector<64x1xf32>, vector<64x1xf32> -> vector<64x1xf32>
    %49 = arith.addf %48, %15 : vector<64x1xf32>
    %50 = vector.broadcast %49 : vector<64x1xf32> to vector<64x256xf32>
    %51 = arith.addf %1, %50 : vector<64x256xf32>
    %c0_40 = arith.constant 0 : index
    %c0_41 = arith.constant 0 : index
    %c0_42 = arith.constant 0 : index
    %52 = vector.load %arg14[%c0_40, %c0_41, %c0_42] : memref<1x64x256xf32, #tpu.memory_space<vmem>>, vector<1x64x256xf32>
    %53 = vector.shape_cast %52 : vector<1x64x256xf32> to vector<64x256xf32>
    %54 = vector.shape_cast %51 : vector<64x256xf32> to vector<1x64x256xf32>
    tpu.vector_store %arg14[%c0_40, %c0_41, %c0_42], %54 {strides = array<i32>} : memref<1x64x256xf32, #tpu.memory_space<vmem>>, vector<1x64x256xf32>,
    return
  }
  func.func @transform_0(%arg0: i32) -> (i32, i32, i32) {
    %c0_i32 = arith.constant 0 : i32
    %c0_i32_0 = arith.constant 0 : i32
    %c0_i32_1 = arith.constant 0 : i32
    return %arg0, %c0_i32, %c0_i32_0 : i32, i32, i32
  }
  func.func @transform_1(%arg0: i32) -> (i32, i32) {
    %c0_i32 = arith.constant 0 : i32
    %c0_i32_0 = arith.constant 0 : i32
    %c0_i32_1 = arith.constant 0 : i32
    return %c0_i32, %c0_i32_0 : i32, i32
  }
  func.func @transform_2(%arg0: i32) -> (i32, i32) {
    %c0_i32 = arith.constant 0 : i32
    %c0_i32_0 = arith.constant 0 : i32
    %c0_i32_1 = arith.constant 0 : i32
    return %c0_i32, %c0_i32_0 : i32, i32
  }
  func.func @transform_3(%arg0: i32) -> (i32, i32) {
    %c0_i32 = arith.constant 0 : i32
    %c0_i32_0 = arith.constant 0 : i32
    %c0_i32_1 = arith.constant 0 : i32
    return %c0_i32, %c0_i32_0 : i32, i32
  }
  func.func @transform_4(%arg0: i32) -> (i32, i32) {
    %c0_i32 = arith.constant 0 : i32
    %c0_i32_0 = arith.constant 0 : i32
    %c0_i32_1 = arith.constant 0 : i32
    return %c0_i32, %c0_i32_0 : i32, i32
  }
  func.func @transform_5(%arg0: i32) -> (i32, i32) {
    %c0_i32 = arith.constant 0 : i32
    %c0_i32_0 = arith.constant 0 : i32
    %c0_i32_1 = arith.constant 0 : i32
    return %c0_i32, %c0_i32_0 : i32, i32
  }
  func.func @transform_6(%arg0: i32) -> (i32, i32) {
    %c0_i32 = arith.constant 0 : i32
    %c0_i32_0 = arith.constant 0 : i32
    %c0_i32_1 = arith.constant 0 : i32
    return %c0_i32, %c0_i32_0 : i32, i32
  }
  func.func @transform_7(%arg0: i32) -> (i32, i32) {
    %c0_i32 = arith.constant 0 : i32
    %c0_i32_0 = arith.constant 0 : i32
    %c0_i32_1 = arith.constant 0 : i32
    return %c0_i32, %c0_i32_0 : i32, i32
  }
  func.func @transform_8(%arg0: i32) -> (i32, i32) {
    %c0_i32 = arith.constant 0 : i32
    %c0_i32_0 = arith.constant 0 : i32
    %c0_i32_1 = arith.constant 0 : i32
    return %c0_i32, %c0_i32_0 : i32, i32
  }
  func.func @transform_9(%arg0: i32) -> (i32, i32) {
    %c0_i32 = arith.constant 0 : i32
    %c0_i32_0 = arith.constant 0 : i32
    %c0_i32_1 = arith.constant 0 : i32
    return %c0_i32, %c0_i32_0 : i32, i32
  }
  func.func @transform_10(%arg0: i32) -> (i32, i32) {
    %c0_i32 = arith.constant 0 : i32
    %c0_i32_0 = arith.constant 0 : i32
    %c0_i32_1 = arith.constant 0 : i32
    return %c0_i32, %c0_i32_0 : i32, i32
  }
  func.func @transform_11(%arg0: i32) -> (i32, i32) {
    %c0_i32 = arith.constant 0 : i32
    %c0_i32_0 = arith.constant 0 : i32
    %c0_i32_1 = arith.constant 0 : i32
    return %c0_i32, %c0_i32_0 : i32, i32
  }
  func.func @transform_12(%arg0: i32) -> (i32, i32) {
    %c0_i32 = arith.constant 0 : i32
    %c0_i32_0 = arith.constant 0 : i32
    %c0_i32_1 = arith.constant 0 : i32
    return %c0_i32, %c0_i32_0 : i32, i32
  }
  func.func @transform_13(%arg0: i32) -> (i32, i32, i32) {
    %c0_i32 = arith.constant 0 : i32
    %c0_i32_0 = arith.constant 0 : i32
    %c0_i32_1 = arith.constant 0 : i32
    return %arg0, %c0_i32, %c0_i32_0 : i32, i32, i32
  }
}

</mosaic_0001>

<llo_original>
// kernel: tpu_custom_call.1
$region0: #{tpu_custom_call.1}
  #allocation0 [shape = 'u32[]', space=smem, size = 0x4, offset = 0x4, fixed_abs, tag = 'smem constant byte address 0x4 - core index']
  #allocation1 [shape = 'u32[72,128]{1,0:T(1,128)}', space=vmem, size = 0x9000, scoped, tag = 'internal scratch']
  %s0 = inlined_call_operand.hbm [shape: f32[2,64,256], index: 0, kind: input, shape index: {}]
  %s1 = inlined_call_operand.vmem [shape: f32[64,1], index: 1, kind: input, shape index: {}]
  %s2 = inlined_call_operand.vmem [shape: f32[64,1], index: 2, kind: input, shape index: {}]
  %s3 = inlined_call_operand.vmem [shape: f32[64,1], index: 3, kind: input, shape index: {}]
  %s4 = inlined_call_operand.vmem [shape: f32[64,1], index: 4, kind: input, shape index: {}]
  %s5 = inlined_call_operand.vmem [shape: f32[64,64], index: 5, kind: input, shape index: {}]
  %s6 = inlined_call_operand.vmem [shape: f32[64,1], index: 6, kind: input, shape index: {}]
  %s7 = inlined_call_operand.vmem [shape: f32[64,1], index: 7, kind: input, shape index: {}]
  %s8 = inlined_call_operand.vmem [shape: f32[64,1], index: 8, kind: input, shape index: {}]
  %s9 = inlined_call_operand.vmem [shape: f32[64,64], index: 9, kind: input, shape index: {}]
  %s10 = inlined_call_operand.vmem [shape: f32[64,1], index: 10, kind: input, shape index: {}]
  %s11 = inlined_call_operand.vmem [shape: f32[2,64], index: 11, kind: input, shape index: {}]
  %s12 = inlined_call_operand.vmem [shape: f32[64,2], index: 12, kind: input, shape index: {}]
  %s13 = inlined_call_operand.hbm [shape: f32[2,64,256], index: 13, kind: output, shape index: {}]
  %s14 = sld [smem:[#allocation0]]
  $region89: #{tpu_custom_call.1} parent=0
    _
  %s16 = ssub.s32 1, %s14
  %s17 = scalar_select 0, %s16, %s14
  $region1: #{tpu_custom_call.1} parent=0
    #allocation2 [shape = 'u8[131072]{0}', space=vmem, size = 0x20000, scoped, tag = 'input window, operand 0']
    #allocation3 [shape = 's32[2]{0}', space=sflag, size = 0x8, scoped, tag = 'scoped memory for tpu_custom_call.1']
    #allocation4 [shape = 's32[2]{0}', space=sflag, size = 0x8, scoped, tag = 'scoped memory for tpu_custom_call.1']
    #allocation5 [shape = 'u8[131072]{0}', space=vmem, size = 0x20000, scoped, tag = 'output window, operand 0']
    %18 = vsyncpa [#allocation3], 0
    %s19 = scalar_lea.sflag [#allocation3], 1
    %20 = vsyncpa %s19, 0
    %21 = vsyncpa [#allocation4], 0
    %s22 = scalar_lea.sflag [#allocation4], 1
    %23 = vsyncpa %s22, 0
    loop: start=0, step=1, limit=4
    $region2: #{tpu_custom_call.1} parent=1 // loop_pre_header
      _
    $region3: #{tpu_custom_call.1} parent=1 // loop_header
      %s25 = sphi 0, %s29
      %p26 = scmp.ge.s32.totalorder %s25, 4
      %s35 = sphi 0, %s37
      %s38 = sphi 0, %s35
      %s39 = sphi 0, %s38
      %s55 = sphi 0, %s39
      %s59 = sphi 0, %s59
      %s61 = sphi 0, %s59
      %s62 = sphi 0, %s61
      %s76 = sphi 0, %s62
      %s80 = sphi 0, %s80
      %s82 = sphi 0, %s80
      %s83 = sphi 0, %s82
      %s97 = sphi 0, %s83
      %s101 = sphi 0, %s101
      %s103 = sphi 0, %s101
      %s104 = sphi 0, %s103
      %s118 = sphi 0, %s104
      %s122 = sphi 0, %s122
      %s124 = sphi 0, %s122
      %s125 = sphi 0, %s124
      %s139 = sphi 0, %s125
      %s143 = sphi 0, %s143
      %s145 = sphi 0, %s143
      %s146 = sphi 0, %s145
      %s160 = sphi 0, %s146
      %s164 = sphi 0, %s164
      %s166 = sphi 0, %s164
      %s167 = sphi 0, %s166
      %s181 = sphi 0, %s167
      %s185 = sphi 0, %s185
      %s187 = sphi 0, %s185
      %s188 = sphi 0, %s187
      %s202 = sphi 0, %s188
      %s206 = sphi 0, %s206
      %s208 = sphi 0, %s206
      %s209 = sphi 0, %s208
      %s223 = sphi 0, %s209
      %s227 = sphi 0, %s227
      %s229 = sphi 0, %s227
      %s230 = sphi 0, %s229
      %s244 = sphi 0, %s230
      %s248 = sphi 0, %s248
      %s250 = sphi 0, %s248
      %s251 = sphi 0, %s250
      %s265 = sphi 0, %s251
      %s269 = sphi 0, %s269
      %s271 = sphi 0, %s269
      %s272 = sphi 0, %s271
      %s286 = sphi 0, %s272
      %s290 = sphi 0, %s290
      %s292 = sphi 0, %s290
      %s293 = sphi 0, %s292
      %s307 = sphi 0, %s293
      %s313 = sphi 0, %s315
      %s316 = sphi 0, %s313
      %s317 = sphi 0, %s316
      %s333 = sphi 0, %s317
    $region4: #{tpu_custom_call.1} parent=1 // loop_header_branch
      %28 = sbr.rel (%p26) target = $region8
    $region5: #{tpu_custom_call.1} parent=1 // loop_body
      %s30 = ssub.s32 %s25, 1
      %s31 = ssub.s32 %s25, 2
      %s32 = sadd.s32 %s25, 1
      %s33 = ssub.s32 %s25, %s32
      %p34 = scmp.eq.s32.totalorder %s33, 0
      %s36 = sadd.s32 %s35, 1
      %s37 = scalar_select %p34, %s35, %s36
      %p40 = pneg %p34
      %p41 = scmp.eq.s32.totalorder %s25, 1
      %p42 = por %p40, %p41
      %p43 = scmp.ne.s32.totalorder %s35, %s38
      %p44 = scmp.eq.s32.totalorder %s25, 0
      %p45 = por %p43, %p44
      %p46 = scmp.ne.s32.totalorder %s35, %s38
      %p47 = scmp.eq.s32.totalorder %s30, 1
      %p48 = por %p46, %p47
      %p49 = scmp.ne.s32.totalorder %s38, %s39
      %p50 = scmp.eq.s32.totalorder %s30, 0
      %p51 = por %p49, %p50
      %p52 = scmp.ne.s32.totalorder %s38, %s39
      %p53 = scmp.eq.s32.totalorder %s31, 1
      %p54 = por %p52, %p53
      %p56 = scmp.ne.s32.totalorder %s39, %s55
      %p57 = scmp.eq.s32.totalorder %s31, 0
      %p58 = por %p56, %p57
      %s60 = sadd.s32 %s59, 1
      %p63 = scmp.eq.s32.totalorder %s25, 1
      %p64 = scmp.ne.s32.totalorder %s59, %s61
      %p65 = scmp.eq.s32.totalorder %s25, 0
      %p66 = por %p64, %p65
      %p67 = scmp.ne.s32.totalorder %s59, %s61
      %p68 = scmp.eq.s32.totalorder %s30, 1
      %p69 = por %p67, %p68
      %p70 = scmp.ne.s32.totalorder %s61, %s62
      %p71 = scmp.eq.s32.totalorder %s30, 0
      %p72 = por %p70, %p71
      %p73 = scmp.ne.s32.totalorder %s61, %s62
      %p74 = scmp.eq.s32.totalorder %s31, 1
      %p75 = por %p73, %p74
      %p77 = scmp.ne.s32.totalorder %s62, %s76
      %p78 = scmp.eq.s32.totalorder %s31, 0
      %p79 = por %p77, %p78
      %s81 = sadd.s32 %s80, 1
      %p84 = scmp.eq.s32.totalorder %s25, 1
      %p85 = scmp.ne.s32.totalorder %s80, %s82
      %p86 = scmp.eq.s32.totalorder %s25, 0
      %p87 = por %p85, %p86
      %p88 = scmp.ne.s32.totalorder %s80, %s82
      %p89 = scmp.eq.s32.totalorder %s30, 1
      %p90 = por %p88, %p89
      %p91 = scmp.ne.s32.totalorder %s82, %s83
      %p92 = scmp.eq.s32.totalorder %s30, 0
      %p93 = por %p91, %p92
      %p94 = scmp.ne.s32.totalorder %s82, %s83
      %p95 = scmp.eq.s32.totalorder %s31, 1
      %p96 = por %p94, %p95
      %p98 = scmp.ne.s32.totalorder %s83, %s97
      %p99 = scmp.eq.s32.totalorder %s31, 0
      %p100 = por %p98, %p99
      %s102 = sadd.s32 %s101, 1
      %p105 = scmp.eq.s32.totalorder %s25, 1
      %p106 = scmp.ne.s32.totalorder %s101, %s103
      %p107 = scmp.eq.s32.totalorder %s25, 0
      %p108 = por %p106, %p107
      %p109 = scmp.ne.s32.totalorder %s101, %s103
      %p110 = scmp.eq.s32.totalorder %s30, 1
      %p111 = por %p109, %p110
      %p112 = scmp.ne.s32.totalorder %s103, %s104
      %p113 = scmp.eq.s32.totalorder %s30, 0
      %p114 = por %p112, %p113
      %p115 = scmp.ne.s32.totalorder %s103, %s104
      %p116 = scmp.eq.s32.totalorder %s31, 1
      %p117 = por %p115, %p116
      %p119 = scmp.ne.s32.totalorder %s104, %s118
      %p120 = scmp.eq.s32.totalorder %s31, 0
      %p121 = por %p119, %p120
      %s123 = sadd.s32 %s122, 1
      %p126 = scmp.eq.s32.totalorder %s25, 1
      %p127 = scmp.ne.s32.totalorder %s122, %s124
      %p128 = scmp.eq.s32.totalorder %s25, 0
      %p129 = por %p127, %p128
      %p130 = scmp.ne.s32.totalorder %s122, %s124
      %p131 = scmp.eq.s32.totalorder %s30, 1
      %p132 = por %p130, %p131
      %p133 = scmp.ne.s32.totalorder %s124, %s125
      %p134 = scmp.eq.s32.totalorder %s30, 0
      %p135 = por %p133, %p134
      %p136 = scmp.ne.s32.totalorder %s124, %s125
      %p137 = scmp.eq.s32.totalorder %s31, 1
      %p138 = por %p136, %p137
      %p140 = scmp.ne.s32.totalorder %s125, %s139
      %p141 = scmp.eq.s32.totalorder %s31, 0
      %p142 = por %p140, %p141
      %s144 = sadd.s32 %s143, 1
      %p147 = scmp.eq.s32.totalorder %s25, 1
      %p148 = scmp.ne.s32.totalorder %s143, %s145
      %p149 = scmp.eq.s32.totalorder %s25, 0
      %p150 = por %p148, %p149
      %p151 = scmp.ne.s32.totalorder %s143, %s145
      %p152 = scmp.eq.s32.totalorder %s30, 1
      %p153 = por %p151, %p152
      %p154 = scmp.ne.s32.totalorder %s145, %s146
      %p155 = scmp.eq.s32.totalorder %s30, 0
      %p156 = por %p154, %p155
      %p157 = scmp.ne.s32.totalorder %s145, %s146
      %p158 = scmp.eq.s32.totalorder %s31, 1
      %p159 = por %p157, %p158
      %p161 = scmp.ne.s32.totalorder %s146, %s160
      %p162 = scmp.eq.s32.totalorder %s31, 0
      %p163 = por %p161, %p162
      %s165 = sadd.s32 %s164, 1
      %p168 = scmp.eq.s32.totalorder %s25, 1
      %p169 = scmp.ne.s32.totalorder %s164, %s166
      %p170 = scmp.eq.s32.totalorder %s25, 0
      %p171 = por %p169, %p170
      %p172 = scmp.ne.s32.totalorder %s164, %s166
      %p173 = scmp.eq.s32.totalorder %s30, 1
      %p174 = por %p172, %p173
      %p175 = scmp.ne.s32.totalorder %s166, %s167
      %p176 = scmp.eq.s32.totalorder %s30, 0
      %p177 = por %p175, %p176
      %p178 = scmp.ne.s32.totalorder %s166, %s167
      %p179 = scmp.eq.s32.totalorder %s31, 1
      %p180 = por %p178, %p179
      %p182 = scmp.ne.s32.totalorder %s167, %s181
      %p183 = scmp.eq.s32.totalorder %s31, 0
      %p184 = por %p182, %p183
      %s186 = sadd.s32 %s185, 1
      %p189 = scmp.eq.s32.totalorder %s25, 1
      %p190 = scmp.ne.s32.totalorder %s185, %s187
      %p191 = scmp.eq.s32.totalorder %s25, 0
      %p192 = por %p190, %p191
      %p193 = scmp.ne.s32.totalorder %s185, %s187
      %p194 = scmp.eq.s32.totalorder %s30, 1
      %p195 = por %p193, %p194
      %p196 = scmp.ne.s32.totalorder %s187, %s188
      %p197 = scmp.eq.s32.totalorder %s30, 0
      %p198 = por %p196, %p197
      %p199 = scmp.ne.s32.totalorder %s187, %s188
      %p200 = scmp.eq.s32.totalorder %s31, 1
      %p201 = por %p199, %p200
      %p203 = scmp.ne.s32.totalorder %s188, %s202
      %p204 = scmp.eq.s32.totalorder %s31, 0
      %p205 = por %p203, %p204
      %s207 = sadd.s32 %s206, 1
      %p210 = scmp.eq.s32.totalorder %s25, 1
      %p211 = scmp.ne.s32.totalorder %s206, %s208
      %p212 = scmp.eq.s32.totalorder %s25, 0
      %p213 = por %p211, %p212
      %p214 = scmp.ne.s32.totalorder %s206, %s208
      %p215 = scmp.eq.s32.totalorder %s30, 1
      %p216 = por %p214, %p215
      %p217 = scmp.ne.s32.totalorder %s208, %s209
      %p218 = scmp.eq.s32.totalorder %s30, 0
      %p219 = por %p217, %p218
      %p220 = scmp.ne.s32.totalorder %s208, %s209
      %p221 = scmp.eq.s32.totalorder %s31, 1
      %p222 = por %p220, %p221
      %p224 = scmp.ne.s32.totalorder %s209, %s223
      %p225 = scmp.eq.s32.totalorder %s31, 0
      %p226 = por %p224, %p225
      %s228 = sadd.s32 %s227, 1
      %p231 = scmp.eq.s32.totalorder %s25, 1
      %p232 = scmp.ne.s32.totalorder %s227, %s229
      %p233 = scmp.eq.s32.totalorder %s25, 0
      %p234 = por %p232, %p233
      %p235 = scmp.ne.s32.totalorder %s227, %s229
      %p236 = scmp.eq.s32.totalorder %s30, 1
      %p237 = por %p235, %p236
      %p238 = scmp.ne.s32.totalorder %s229, %s230
      %p239 = scmp.eq.s32.totalorder %s30, 0
      %p240 = por %p238, %p239
      %p241 = scmp.ne.s32.totalorder %s229, %s230
      %p242 = scmp.eq.s32.totalorder %s31, 1
      %p243 = por %p241, %p242
      %p245 = scmp.ne.s32.totalorder %s230, %s244
      %p246 = scmp.eq.s32.totalorder %s31, 0
      %p247 = por %p245, %p246
      %s249 = sadd.s32 %s248, 1
      %p252 = scmp.eq.s32.totalorder %s25, 1
      %p253 = scmp.ne.s32.totalorder %s248, %s250
      %p254 = scmp.eq.s32.totalorder %s25, 0
      %p255 = por %p253, %p254
      %p256 = scmp.ne.s32.totalorder %s248, %s250
      %p257 = scmp.eq.s32.totalorder %s30, 1
      %p258 = por %p256, %p257
      %p259 = scmp.ne.s32.totalorder %s250, %s251
      %p260 = scmp.eq.s32.totalorder %s30, 0
      %p261 = por %p259, %p260
      %p262 = scmp.ne.s32.totalorder %s250, %s251
      %p263 = scmp.eq.s32.totalorder %s31, 1
      %p264 = por %p262, %p263
      %p266 = scmp.ne.s32.totalorder %s251, %s265
      %p267 = scmp.eq.s32.totalorder %s31, 0
      %p268 = por %p266, %p267
      %s270 = sadd.s32 %s269, 1
      %p273 = scmp.eq.s32.totalorder %s25, 1
      %p274 = scmp.ne.s32.totalorder %s269, %s271
      %p275 = scmp.eq.s32.totalorder %s25, 0
      %p276 = por %p274, %p275
      %p277 = scmp.ne.s32.totalorder %s269, %s271
      %p278 = scmp.eq.s32.totalorder %s30, 1
      %p279 = por %p277, %p278
      %p280 = scmp.ne.s32.totalorder %s271, %s272
      %p281 = scmp.eq.s32.totalorder %s30, 0
      %p282 = por %p280, %p281
      %p283 = scmp.ne.s32.totalorder %s271, %s272
      %p284 = scmp.eq.s32.totalorder %s31, 1
      %p285 = por %p283, %p284
      %p287 = scmp.ne.s32.totalorder %s272, %s286
      %p288 = scmp.eq.s32.totalorder %s31, 0
      %p289 = por %p287, %p288
      %s291 = sadd.s32 %s290, 1
      %p294 = scmp.eq.s32.totalorder %s25, 1
      %p295 = scmp.ne.s32.totalorder %s290, %s292
      %p296 = scmp.eq.s32.totalorder %s25, 0
      %p297 = por %p295, %p296
      %p298 = scmp.ne.s32.totalorder %s290, %s292
      %p299 = scmp.eq.s32.totalorder %s30, 1
      %p300 = por %p298, %p299
      %p301 = scmp.ne.s32.totalorder %s292, %s293
      %p302 = scmp.eq.s32.totalorder %s30, 0
      %p303 = por %p301, %p302
      %p304 = scmp.ne.s32.totalorder %s292, %s293
      %p305 = scmp.eq.s32.totalorder %s31, 1
      %p306 = por %p304, %p305
      %p308 = scmp.ne.s32.totalorder %s293, %s307
      %p309 = scmp.eq.s32.totalorder %s31, 0
      %p310 = por %p308, %p309
      %s311 = ssub.s32 %s25, %s32
      %p312 = scmp.eq.s32.totalorder %s311, 0
      %s314 = sadd.s32 %s313, 1
      %s315 = scalar_select %p312, %s313, %s314
      %p318 = pneg %p312
      %p319 = scmp.eq.s32.totalorder %s25, 1
      %p320 = por %p318, %p319
      %p321 = scmp.ne.s32.totalorder %s313, %s316
      %p322 = scmp.eq.s32.totalorder %s25, 0
      %p323 = por %p321, %p322
      %p324 = scmp.ne.s32.totalorder %s313, %s316
      %p325 = scmp.eq.s32.totalorder %s30, 1
      %p326 = por %p324, %p325
      %p327 = scmp.ne.s32.totalorder %s316, %s317
      %p328 = scmp.eq.s32.totalorder %s30, 0
      %p329 = por %p327, %p328
      %p330 = scmp.ne.s32.totalorder %s316, %s317
      %p331 = scmp.eq.s32.totalorder %s31, 1
      %p332 = por %p330, %p331
      %p334 = scmp.ne.s32.totalorder %s317, %s333
      %p335 = scmp.eq.s32.totalorder %s31, 0
      %p336 = por %p334, %p335
      %p337 = scmp.le.s32.totalorder 1, %s25
      %p338 = scmp.lt.s32.totalorder %s25, 3
      %p339 = pnand %p337, %p338
      %p340 = pneg %p339
      // Predicated region
      $region9: #{tpu_custom_call.1} parent=5 // pred_check
        _
      $region10: #{tpu_custom_call.1} parent=5 // pred_check_branch
        %342 = sbr.rel (%p339) target = $region12
      $region11: #{tpu_custom_call.1} parent=5 // pred_region
        %s343 = ssub.s32 %s25, 1
        // Predicated region
        $region13: #{tpu_custom_call.1} parent=11 // pred_check
          %p344 = pneg %p72
        $region14: #{tpu_custom_call.1} parent=11 // pred_check_branch
          %346 = sbr.rel (%p344) target = $region16
        $region15: #{tpu_custom_call.1} parent=11 // pred_region
          _
        $region16: #{tpu_custom_call.1} parent=11 // pred_fallthru
          _
        // Predicated region
        $region17: #{tpu_custom_call.1} parent=11 // pred_check
          %p347 = pneg %p93
        $region18: #{tpu_custom_call.1} parent=11 // pred_check_branch
          %349 = sbr.rel (%p347) target = $region20
        $region19: #{tpu_custom_call.1} parent=11 // pred_region
          _
        $region20: #{tpu_custom_call.1} parent=11 // pred_fallthru
          _
        // Predicated region
        $region21: #{tpu_custom_call.1} parent=11 // pred_check
          %p350 = pneg %p114
        $region22: #{tpu_custom_call.1} parent=11 // pred_check_branch
          %352 = sbr.rel (%p350) target = $region24
        $region23: #{tpu_custom_call.1} parent=11 // pred_region
          _
        $region24: #{tpu_custom_call.1} parent=11 // pred_fallthru
          _
        // Predicated region
        $region25: #{tpu_custom_call.1} parent=11 // pred_check
          %p353 = pneg %p135
        $region26: #{tpu_custom_call.1} parent=11 // pred_check_branch
          %355 = sbr.rel (%p353) target = $region28
        $region27: #{tpu_custom_call.1} parent=11 // pred_region
          _
        $region28: #{tpu_custom_call.1} parent=11 // pred_fallthru
          _
        // Predicated region
        $region29: #{tpu_custom_call.1} parent=11 // pred_check
          %p356 = pneg %p156
        $region30: #{tpu_custom_call.1} parent=11 // pred_check_branch
          %358 = sbr.rel (%p356) target = $region32
        $region31: #{tpu_custom_call.1} parent=11 // pred_region
          _
        $region32: #{tpu_custom_call.1} parent=11 // pred_fallthru
          _
        // Predicated region
        $region33: #{tpu_custom_call.1} parent=11 // pred_check
          %p359 = pneg %p177
        $region34: #{tpu_custom_call.1} parent=11 // pred_check_branch
          %361 = sbr.rel (%p359) target = $region36
        $region35: #{tpu_custom_call.1} parent=11 // pred_region
          _
        $region36: #{tpu_custom_call.1} parent=11 // pred_fallthru
          _
        // Predicated region
        $region37: #{tpu_custom_call.1} parent=11 // pred_check
          %p362 = pneg %p198
        $region38: #{tpu_custom_call.1} parent=11 // pred_check_branch
          %364 = sbr.rel (%p362) target = $region40
        $region39: #{tpu_custom_call.1} parent=11 // pred_region
          _
        $region40: #{tpu_custom_call.1} parent=11 // pred_fallthru
          _
        // Predicated region
        $region41: #{tpu_custom_call.1} parent=11 // pred_check
          %p365 = pneg %p219
        $region42: #{tpu_custom_call.1} parent=11 // pred_check_branch
          %367 = sbr.rel (%p365) target = $region44
        $region43: #{tpu_custom_call.1} parent=11 // pred_region
          _
        $region44: #{tpu_custom_call.1} parent=11 // pred_fallthru
          _
        // Predicated region
        $region45: #{tpu_custom_call.1} parent=11 // pred_check
          %p368 = pneg %p240
        $region46: #{tpu_custom_call.1} parent=11 // pred_check_branch
          %370 = sbr.rel (%p368) target = $region48
        $region47: #{tpu_custom_call.1} parent=11 // pred_region
          _
        $region48: #{tpu_custom_call.1} parent=11 // pred_fallthru
          _
        // Predicated region
        $region49: #{tpu_custom_call.1} parent=11 // pred_check
          %p371 = pneg %p261
        $region50: #{tpu_custom_call.1} parent=11 // pred_check_branch
          %373 = sbr.rel (%p371) target = $region52
        $region51: #{tpu_custom_call.1} parent=11 // pred_region
          _
        $region52: #{tpu_custom_call.1} parent=11 // pred_fallthru
          _
        // Predicated region
        $region53: #{tpu_custom_call.1} parent=11 // pred_check
          %p374 = pneg %p282
        $region54: #{tpu_custom_call.1} parent=11 // pred_check_branch
          %376 = sbr.rel (%p374) target = $region56
        $region55: #{tpu_custom_call.1} parent=11 // pred_region
          _
        $region56: #{tpu_custom_call.1} parent=11 // pred_fallthru
          _
        // Predicated region
        $region57: #{tpu_custom_call.1} parent=11 // pred_check
          %p377 = pneg %p303
        $region58: #{tpu_custom_call.1} parent=11 // pred_check_branch
          %379 = sbr.rel (%p377) target = $region60
        $region59: #{tpu_custom_call.1} parent=11 // pred_region
          _
        $region60: #{tpu_custom_call.1} parent=11 // pred_fallthru
          _
      $region12: #{tpu_custom_call.1} parent=5 // pred_fallthru
        _
      %p380 = scmp.lt.s32.totalorder %s25, 2
      // Predicated region
      $region61: #{tpu_custom_call.1} parent=5 // pred_check
        %p381 = pneg %p380
      $region62: #{tpu_custom_call.1} parent=5 // pred_check_branch
        %383 = sbr.rel (%p381) target = $region64
      $region63: #{tpu_custom_call.1} parent=5 // pred_region
        // Predicated region
        $region65: #{tpu_custom_call.1} parent=63 // pred_check
          %p384 = pneg %p45
        $region66: #{tpu_custom_call.1} parent=63 // pred_check_branch
          %386 = sbr.rel (%p384) target = $region68
        $region67: #{tpu_custom_call.1} parent=63 // pred_region
          %s387 = sand.u32 %s35, 1
          %s388 = scalar_lea.sflag [#allocation3], %s387
          %s389 = sand.u32 %s35, 1
          %s390 = smul.addr %s389, 128
          %s391 = scalar_lea.vmem [#allocation2], %s390
          %393 = vsyncadd %s388, 0
          %s394 = smul.addr %s25, 16
          %s395 = smul.addr %s394, 8
          %s396 = scalar_lea.hbm %s0, %s395
          %s397 = sshll.u32 %s396, 4
          %s398 = int_to_ptr.hbm [resolvable:$true] %s397
          %s399 = sshll.u32 %s391, 4
          %s400 = int_to_ptr.vmem [resolvable:$true] %s399
          %405 = dma.hbm_to_vmem [thread:$0]  %s398, 2048, %s400, %s388, 256, 256, 16
        $region68: #{tpu_custom_call.1} parent=63 // pred_fallthru
          _
      $region64: #{tpu_custom_call.1} parent=5 // pred_fallthru
        _
      %p406 = scmp.le.s32.totalorder 1, %s25
      %p407 = scmp.lt.s32.totalorder %s25, 3
      %p408 = pnand %p406, %p407
      %p409 = pneg %p408
      // Predicated region
      $region69: #{tpu_custom_call.1} parent=5 // pred_check
        _
      $region70: #{tpu_custom_call.1} parent=5 // pred_check_branch
        %411 = sbr.rel (%p408) target = $region72
      $region71: #{tpu_custom_call.1} parent=5 // pred_region
        %s412 = ssub.s32 %s25, 1
        %s413 = sand.u32 %s38, 1
        %s414 = scalar_lea.sflag [#allocation3], %s413
        %s415 = sand.u32 %s38, 1
        %s416 = smul.addr %s415, 128
        %s417 = scalar_lea.vmem [#allocation2], %s416
        // Predicated region
        $region73: #{tpu_custom_call.1} parent=71 // pred_check
          %p418 = pneg %p51
        $region74: #{tpu_custom_call.1} parent=71 // pred_check_branch
          %420 = sbr.rel (%p418) target = $region76
        $region75: #{tpu_custom_call.1} parent=71 // pred_region
          %422 = dma.done %s414, 2048
        $region76: #{tpu_custom_call.1} parent=71 // pred_fallthru
          _
        %s423 = sand.u32 %s38, 1
        %s424 = scalar_lea.sflag [#allocation3], %s423
        %s425 = sand.u32 %s38, 1
        %s426 = smul.addr %s425, 128
        %s427 = scalar_lea.vmem [#allocation2], %s426
        %p428 = pneg %p51
        %p429 = pneg %p48
        %p430 = pneg %p72
        %p431 = pneg %p69
        %p432 = pneg %p93
        %p433 = pneg %p90
        %p434 = pneg %p114
        %p435 = pneg %p111
        %p436 = pneg %p135
        %p437 = pneg %p132
        %p438 = pneg %p156
        %p439 = pneg %p153
        %p440 = pneg %p177
        %p441 = pneg %p174
        %p442 = pneg %p198
        %p443 = pneg %p195
        %p444 = pneg %p219
        %p445 = pneg %p216
        %p446 = pneg %p240
        %p447 = pneg %p237
        %p448 = pneg %p261
        %p449 = pneg %p258
        %p450 = pneg %p282
        %p451 = pneg %p279
        %p452 = pneg %p303
        %p453 = pneg %p300
        %p454 = pneg %p329
        %p455 = pneg %p326
        %s456 = sand.u32 %s316, 1
        %s457 = scalar_lea.sflag [#allocation4], %s456
        %s458 = sand.u32 %s316, 1
        %s459 = smul.addr %s458, 128
        %s460 = scalar_lea.vmem [#allocation5], %s459
        %v461 = vld [vmem:[%s417] sm:$0xff]
        %v462 = vld [vmem:[%s417 + $0x8] sm:$0xff]
        %v463 = vld [vmem:[%s417 + $0x10] sm:$0xff]
        %v464 = vld [vmem:[%s417 + $0x18] sm:$0xff]
        %v465 = vld [vmem:[%s417 + $0x20] sm:$0xff]
        %v466 = vld [vmem:[%s417 + $0x28] sm:$0xff]
        %v467 = vld [vmem:[%s417 + $0x30] sm:$0xff]
        %v468 = vld [vmem:[%s417 + $0x38] sm:$0xff]
        %v469 = vld [vmem:[%s417 + $0x40] sm:$0xff]
        %v470 = vld [vmem:[%s417 + $0x48] sm:$0xff]
        %v471 = vld [vmem:[%s417 + $0x50] sm:$0xff]
        %v472 = vld [vmem:[%s417 + $0x58] sm:$0xff]
        %v473 = vld [vmem:[%s417 + $0x60] sm:$0xff]
        %v474 = vld [vmem:[%s417 + $0x68] sm:$0xff]
        %v475 = vld [vmem:[%s417 + $0x70] sm:$0xff]
        %v476 = vld [vmem:[%s417 + $0x78] sm:$0xff]
        %v477 = vadd.f32 %v461, %v462
        %478 = vadd.xlane.f32.xlu0 %v477
        %v479 = vpop.xlane.xlu0 %478
        %v480 = vadd.f32 %v463, %v464
        %481 = vadd.xlane.f32.xlu0 %v480
        %v482 = vpop.xlane.xlu0 %481
        %v483 = vadd.f32 %v465, %v466
        %484 = vadd.xlane.f32.xlu0 %v483
        %v485 = vpop.xlane.xlu0 %484
        %v486 = vadd.f32 %v467, %v468
        %487 = vadd.xlane.f32.xlu0 %v486
        %v488 = vpop.xlane.xlu0 %487
        %v489 = vadd.f32 %v469, %v470
        %490 = vadd.xlane.f32.xlu0 %v489
        %v491 = vpop.xlane.xlu0 %490
        %v492 = vadd.f32 %v471, %v472
        %493 = vadd.xlane.f32.xlu0 %v492
        %v494 = vpop.xlane.xlu0 %493
        %v495 = vadd.f32 %v473, %v474
        %496 = vadd.xlane.f32.xlu0 %v495
        %v497 = vpop.xlane.xlu0 %496
        %v498 = vadd.f32 %v475, %v476
        %499 = vadd.xlane.f32.xlu0 %v498
        %v500 = vpop.xlane.xlu0 %499
        %v501 = vmul.f32 %v479, 0.00390625
        %v502 = vmul.f32 %v482, 0.00390625
        %v503 = vmul.f32 %v485, 0.00390625
        %v504 = vmul.f32 %v488, 0.00390625
        %v505 = vmul.f32 %v491, 0.00390625
        %v506 = vmul.f32 %v494, 0.00390625
        %v507 = vmul.f32 %v497, 0.00390625
        %v508 = vmul.f32 %v500, 0.00390625
        %v509 = vld [vmem:[%s1] sm:$0xff]
        %v510 = vld [vmem:[%s1 + $0x8] sm:$0xff]
        %v511 = vld [vmem:[%s1 + $0x10] sm:$0xff]
        %v512 = vld [vmem:[%s1 + $0x18] sm:$0xff]
        %v513 = vld [vmem:[%s1 + $0x20] sm:$0xff]
        %v514 = vld [vmem:[%s1 + $0x28] sm:$0xff]
        %v515 = vld [vmem:[%s1 + $0x30] sm:$0xff]
        %v516 = vld [vmem:[%s1 + $0x38] sm:$0xff]
        %v517 = vld [vmem:[%s2] sm:$0xff]
        %v518 = vld [vmem:[%s2 + $0x8] sm:$0xff]
        %v519 = vld [vmem:[%s2 + $0x10] sm:$0xff]
        %v520 = vld [vmem:[%s2 + $0x18] sm:$0xff]
        %v521 = vld [vmem:[%s2 + $0x20] sm:$0xff]
        %v522 = vld [vmem:[%s2 + $0x28] sm:$0xff]
        %v523 = vld [vmem:[%s2 + $0x30] sm:$0xff]
        %v524 = vld [vmem:[%s2 + $0x38] sm:$0xff]
        %v525 = vld [vmem:[%s3] sm:$0xff]
        %v526 = vld [vmem:[%s3 + $0x8] sm:$0xff]
        %v527 = vld [vmem:[%s3 + $0x10] sm:$0xff]
        %v528 = vld [vmem:[%s3 + $0x18] sm:$0xff]
        %v529 = vld [vmem:[%s3 + $0x20] sm:$0xff]
        %v530 = vld [vmem:[%s3 + $0x28] sm:$0xff]
        %v531 = vld [vmem:[%s3 + $0x30] sm:$0xff]
        %v532 = vld [vmem:[%s3 + $0x38] sm:$0xff]
        %v533 = vld [vmem:[%s4] sm:$0xff]
        %v534 = vld [vmem:[%s4 + $0x8] sm:$0xff]
        %v535 = vld [vmem:[%s4 + $0x10] sm:$0xff]
        %v536 = vld [vmem:[%s4 + $0x18] sm:$0xff]
        %v537 = vld [vmem:[%s4 + $0x20] sm:$0xff]
        %v538 = vld [vmem:[%s4 + $0x28] sm:$0xff]
        %v539 = vld [vmem:[%s4 + $0x30] sm:$0xff]
        %v540 = vld [vmem:[%s4 + $0x38] sm:$0xff]
        %v541 = vld [vmem:[%s5] sm:$0xff]
        %v542 = vld [vmem:[%s5 + $0x8] sm:$0xff]
        %v543 = vld [vmem:[%s5 + $0x10] sm:$0xff]
        %v544 = vld [vmem:[%s5 + $0x18] sm:$0xff]
        %v545 = vld [vmem:[%s5 + $0x20] sm:$0xff]
        %v546 = vld [vmem:[%s5 + $0x28] sm:$0xff]
        %v547 = vld [vmem:[%s5 + $0x30] sm:$0xff]
        %v548 = vld [vmem:[%s5 + $0x38] sm:$0xff]
        %v549 = vld [vmem:[%s6] sm:$0xff]
        %v550 = vld [vmem:[%s6 + $0x8] sm:$0xff]
        %v551 = vld [vmem:[%s6 + $0x10] sm:$0xff]
        %v552 = vld [vmem:[%s6 + $0x18] sm:$0xff]
        %v553 = vld [vmem:[%s6 + $0x20] sm:$0xff]
        %v554 = vld [vmem:[%s6 + $0x28] sm:$0xff]
        %v555 = vld [vmem:[%s6 + $0x30] sm:$0xff]
        %v556 = vld [vmem:[%s6 + $0x38] sm:$0xff]
        %v557 = vld [vmem:[%s7] sm:$0xff]
        %v558 = vld [vmem:[%s7 + $0x8] sm:$0xff]
        %v559 = vld [vmem:[%s7 + $0x10] sm:$0xff]
        %v560 = vld [vmem:[%s7 + $0x18] sm:$0xff]
        %v561 = vld [vmem:[%s7 + $0x20] sm:$0xff]
        %v562 = vld [vmem:[%s7 + $0x28] sm:$0xff]
        %v563 = vld [vmem:[%s7 + $0x30] sm:$0xff]
        %v564 = vld [vmem:[%s7 + $0x38] sm:$0xff]
        %v565 = vld [vmem:[%s8] sm:$0xff]
        %v566 = vld [vmem:[%s8 + $0x8] sm:$0xff]
        %v567 = vld [vmem:[%s8 + $0x10] sm:$0xff]
        %v568 = vld [vmem:[%s8 + $0x18] sm:$0xff]
        %v569 = vld [vmem:[%s8 + $0x20] sm:$0xff]
        %v570 = vld [vmem:[%s8 + $0x28] sm:$0xff]
        %v571 = vld [vmem:[%s8 + $0x30] sm:$0xff]
        %v572 = vld [vmem:[%s8 + $0x38] sm:$0xff]
        %v573 = vld [vmem:[%s9] sm:$0xff]
        %v574 = vld [vmem:[%s9 + $0x8] sm:$0xff]
        %v575 = vld [vmem:[%s9 + $0x10] sm:$0xff]
        %v576 = vld [vmem:[%s9 + $0x18] sm:$0xff]
        %v577 = vld [vmem:[%s9 + $0x20] sm:$0xff]
        %v578 = vld [vmem:[%s9 + $0x28] sm:$0xff]
        %v579 = vld [vmem:[%s9 + $0x30] sm:$0xff]
        %v580 = vld [vmem:[%s9 + $0x38] sm:$0xff]
        %v581 = vld [vmem:[%s10] sm:$0xff]
        %v582 = vld [vmem:[%s10 + $0x8] sm:$0xff]
        %v583 = vld [vmem:[%s10 + $0x10] sm:$0xff]
        %v584 = vld [vmem:[%s10 + $0x18] sm:$0xff]
        %v585 = vld [vmem:[%s10 + $0x20] sm:$0xff]
        %v586 = vld [vmem:[%s10 + $0x28] sm:$0xff]
        %v587 = vld [vmem:[%s10 + $0x30] sm:$0xff]
        %v588 = vld [vmem:[%s10 + $0x38] sm:$0xff]
        %v589 = vld [vmem:[%s11] sm:$0x3]
        %v590 = vld [vmem:[%s12] sm:$0xff]
        %v591 = vld [vmem:[%s12 + $0x8] sm:$0xff]
        %v592 = vld [vmem:[%s12 + $0x10] sm:$0xff]
        %v593 = vld [vmem:[%s12 + $0x18] sm:$0xff]
        %v594 = vld [vmem:[%s12 + $0x20] sm:$0xff]
        %v595 = vld [vmem:[%s12 + $0x28] sm:$0xff]
        %v596 = vld [vmem:[%s12 + $0x30] sm:$0xff]
        %v597 = vld [vmem:[%s12 + $0x38] sm:$0xff]
        %v598 = vmul.f32 %v501, %v509
        %v599 = vmul.f32 %v502, %v510
        %v600 = vmul.f32 %v503, %v511
        %v601 = vmul.f32 %v504, %v512
        %v602 = vmul.f32 %v505, %v513
        %v603 = vmul.f32 %v506, %v514
        %v604 = vmul.f32 %v507, %v515
        %v605 = vmul.f32 %v508, %v516
        %v606 = vadd.f32 %v598, %v517
        %v607 = vadd.f32 %v599, %v518
        %v608 = vadd.f32 %v600, %v519
        %v609 = vadd.f32 %v601, %v520
        %v610 = vadd.f32 %v602, %v521
        %v611 = vadd.f32 %v603, %v522
        %v612 = vadd.f32 %v604, %v523
        %v613 = vadd.f32 %v605, %v524
        %vm614 = vcmask 523264
        %v616 = vsel %vm614, %v589, 0
        %618 = vmatpush.msra.mxu0 0.0
        %619 = vmatpush.msra.mxu0 0.0
        %620 = vmatpush.msra.mxu0 0.0
        %621 = vmatpush.msra.mxu0 0.0
        %622 = vmatpush.msra.mxu0 0.0
        %623 = vmatpush.msra.mxu0 0.0
        %624 = vmatpush.msra.mxu0 0.0
        %625 = vmatpush.msra.mxu0 0.0
        %626 = vmatpush.msra.mxu0 %v613
        %627 = vmatpush.msra.mxu0 %v612
        %628 = vmatpush.msra.mxu0 %v611
        %629 = vmatpush.msra.mxu0 %v610
        %630 = vmatpush.msra.mxu0 %v609
        %631 = vmatpush.msra.mxu0 %v608
        %632 = vmatpush.msra.mxu0 %v607
        %633 = vmatpush.msra.mxu0 %v606
        %634 = vmatmul.f32.gmra.mxu0 %v616
        %v635 = vpop.f32.mrf.mxu0
        %v636 = vadd.f32 0.0, %v635
        %637 = vdwg.mxu0
        %vm638 = vcmask 15360
        %v640 = vsel %vm638, %v590, 0
        %v643 = vsel %vm638, %v591, 0
        %v646 = vsel %vm638, %v592, 0
        %v649 = vsel %vm638, %v593, 0
        %v652 = vsel %vm638, %v594, 0
        %v655 = vsel %vm638, %v595, 0
        %v658 = vsel %vm638, %v596, 0
        %v661 = vsel %vm638, %v597, 0
        %vm663 = vcmask 1041408
        %v665 = vsel %vm663, %v636, 0
        %667 = vmatpush.msra.mxu0 0.0
        %668 = vmatpush.msra.mxu0 0.0
        %669 = vmatpush.msra.mxu0 0.0
        %670 = vmatpush.msra.mxu0 0.0
        %671 = vmatpush.msra.mxu0 0.0
        %672 = vmatpush.msra.mxu0 0.0
        %673 = vmatpush.msra.mxu0 0.0
        %674 = vmatpush.msra.mxu0 0.0
        %675 = vmatpush.msra.mxu0 0.0
        %676 = vmatpush.msra.mxu0 0.0
        %677 = vmatpush.msra.mxu0 0.0
        %678 = vmatpush.msra.mxu0 0.0
        %679 = vmatpush.msra.mxu0 0.0
        %680 = vmatpush.msra.mxu0 0.0
        %681 = vmatpush.msra.mxu0 0.0
        %682 = vmatpush.msra.mxu0 %v665
        %683 = vmatmul.f32.gmra.mxu0 %v640
        %v684 = vpop.f32.mrf.mxu0
        %v685 = vadd.f32 0.0, %v684
        %686 = vmatmul.f32.gmra.mxu0 %v643
        %v687 = vpop.f32.mrf.mxu0
        %v688 = vadd.f32 0.0, %v687
        %689 = vmatmul.f32.gmra.mxu0 %v646
        %v690 = vpop.f32.mrf.mxu0
        %v691 = vadd.f32 0.0, %v690
        %692 = vmatmul.f32.gmra.mxu0 %v649
        %v693 = vpop.f32.mrf.mxu0
        %v694 = vadd.f32 0.0, %v693
        %695 = vmatmul.f32.gmra.mxu0 %v652
        %v696 = vpop.f32.mrf.mxu0
        %v697 = vadd.f32 0.0, %v696
        %698 = vmatmul.f32.gmra.mxu0 %v655
        %v699 = vpop.f32.mrf.mxu0
        %v700 = vadd.f32 0.0, %v699
        %701 = vmatmul.f32.gmra.mxu0 %v658
        %v702 = vpop.f32.mrf.mxu0
        %v703 = vadd.f32 0.0, %v702
        %704 = vmatmul.f32.gmra.mxu0 %v661
        %v705 = vpop.f32.mrf.mxu0
        %v706 = vadd.f32 0.0, %v705
        %707 = vdwg.mxu0
        %v708 = vsub.f32 %v606, %v685
        %v709 = vsub.f32 %v607, %v688
        %v710 = vsub.f32 %v608, %v691
        %v711 = vsub.f32 %v609, %v694
        %v712 = vsub.f32 %v610, %v697
        %v713 = vsub.f32 %v611, %v700
        %v714 = vsub.f32 %v612, %v703
        %v715 = vsub.f32 %v613, %v706
        %v716 = vmul.f32 %v708, %v708
        %v717 = vmul.f32 %v709, %v709
        %v718 = vmul.f32 %v710, %v710
        %v719 = vmul.f32 %v711, %v711
        %v720 = vmul.f32 %v712, %v712
        %v721 = vmul.f32 %v713, %v713
        %v722 = vmul.f32 %v714, %v714
        %v723 = vmul.f32 %v715, %v715
        %724 = vmatpush.msra.mxu0 0.0
        %725 = vmatpush.msra.mxu0 0.0
        %726 = vmatpush.msra.mxu0 0.0
        %727 = vmatpush.msra.mxu0 0.0
        %728 = vmatpush.msra.mxu0 0.0
        %729 = vmatpush.msra.mxu0 0.0
        %730 = vmatpush.msra.mxu0 0.0
        %731 = vmatpush.msra.mxu0 0.0
        %732 = vmatpush.msra.mxu0 %v723
        %733 = vmatpush.msra.mxu0 %v722
        %734 = vmatpush.msra.mxu0 %v721
        %735 = vmatpush.msra.mxu0 %v720
        %736 = vmatpush.msra.mxu0 %v719
        %737 = vmatpush.msra.mxu0 %v718
        %738 = vmatpush.msra.mxu0 %v717
        %739 = vmatpush.msra.mxu0 %v716
        %740 = vmatmul.f32.gmra.mxu0 %v616
        %v741 = vpop.f32.mrf.mxu0
        %v742 = vadd.f32 0.0, %v741
        %743 = vdwg.mxu0
        %v745 = vsel %vm663, %v742, 0
        %747 = vmatpush.msra.mxu0 0.0
        %748 = vmatpush.msra.mxu0 0.0
        %749 = vmatpush.msra.mxu0 0.0
        %750 = vmatpush.msra.mxu0 0.0
        %751 = vmatpush.msra.mxu0 0.0
        %752 = vmatpush.msra.mxu0 0.0
        %753 = vmatpush.msra.mxu0 0.0
        %754 = vmatpush.msra.mxu0 0.0
        %755 = vmatpush.msra.mxu0 0.0
        %756 = vmatpush.msra.mxu0 0.0
        %757 = vmatpush.msra.mxu0 0.0
        %758 = vmatpush.msra.mxu0 0.0
        %759 = vmatpush.msra.mxu0 0.0
        %760 = vmatpush.msra.mxu0 0.0
        %761 = vmatpush.msra.mxu0 0.0
        %762 = vmatpush.msra.mxu0 %v745
        %763 = vmatmul.f32.gmra.mxu0 %v640
        %v764 = vpop.f32.mrf.mxu0
        %v765 = vadd.f32 1e-05, %v764
        %766 = vmatmul.f32.gmra.mxu0 %v643
        %v767 = vpop.f32.mrf.mxu0
        %v768 = vadd.f32 1e-05, %v767
        %769 = vmatmul.f32.gmra.mxu0 %v646
        %v770 = vpop.f32.mrf.mxu0
        %v771 = vadd.f32 1e-05, %v770
        %772 = vmatmul.f32.gmra.mxu0 %v649
        %v773 = vpop.f32.mrf.mxu0
        %v774 = vadd.f32 1e-05, %v773
        %775 = vmatmul.f32.gmra.mxu0 %v652
        %v776 = vpop.f32.mrf.mxu0
        %v777 = vadd.f32 1e-05, %v776
        %778 = vmatmul.f32.gmra.mxu0 %v655
        %v779 = vpop.f32.mrf.mxu0
        %v780 = vadd.f32 1e-05, %v779
        %781 = vmatmul.f32.gmra.mxu0 %v658
        %v782 = vpop.f32.mrf.mxu0
        %v783 = vadd.f32 1e-05, %v782
        %784 = vmatmul.f32.gmra.mxu0 %v661
        %v785 = vpop.f32.mrf.mxu0
        %v786 = vadd.f32 1e-05, %v785
        %787 = vdwg.mxu0
        %v788 = vrsqrt.pop %v765
        %v789 = vmul.f32 %v788, %v765
        %v790 = vmul.f32 %v789, %v788
        %v791 = vmul.f32 0.5, %v790
        %v792 = vsub.f32 1.5, %v791
        %v793 = vmul.f32 %v788, %v792
        %vm794 = vweird.f32 %v765
        %vm795 = vweird.f32 %v788
        %vm796 = vmor %vm794, %vm795
        %v797 = vsel %vm796, %v788, %v793
        %v798 = vrsqrt.pop %v768
        %v799 = vmul.f32 %v798, %v768
        %v800 = vmul.f32 %v799, %v798
        %v801 = vmul.f32 0.5, %v800
        %v802 = vsub.f32 1.5, %v801
        %v803 = vmul.f32 %v798, %v802
        %vm804 = vweird.f32 %v768
        %vm805 = vweird.f32 %v798
        %vm806 = vmor %vm804, %vm805
        %v807 = vsel %vm806, %v798, %v803
        %v808 = vrsqrt.pop %v771
        %v809 = vmul.f32 %v808, %v771
        %v810 = vmul.f32 %v809, %v808
        %v811 = vmul.f32 0.5, %v810
        %v812 = vsub.f32 1.5, %v811
        %v813 = vmul.f32 %v808, %v812
        %vm814 = vweird.f32 %v771
        %vm815 = vweird.f32 %v808
        %vm816 = vmor %vm814, %vm815
        %v817 = vsel %vm816, %v808, %v813
        %v818 = vrsqrt.pop %v774
        %v819 = vmul.f32 %v818, %v774
        %v820 = vmul.f32 %v819, %v818
        %v821 = vmul.f32 0.5, %v820
        %v822 = vsub.f32 1.5, %v821
        %v823 = vmul.f32 %v818, %v822
        %vm824 = vweird.f32 %v774
        %vm825 = vweird.f32 %v818
        %vm826 = vmor %vm824, %vm825
        %v827 = vsel %vm826, %v818, %v823
        %v828 = vrsqrt.pop %v777
        %v829 = vmul.f32 %v828, %v777
        %v830 = vmul.f32 %v829, %v828
        %v831 = vmul.f32 0.5, %v830
        %v832 = vsub.f32 1.5, %v831
        %v833 = vmul.f32 %v828, %v832
        %vm834 = vweird.f32 %v777
        %vm835 = vweird.f32 %v828
        %vm836 = vmor %vm834, %vm835
        %v837 = vsel %vm836, %v828, %v833
        %v838 = vrsqrt.pop %v780
        %v839 = vmul.f32 %v838, %v780
        %v840 = vmul.f32 %v839, %v838
        %v841 = vmul.f32 0.5, %v840
        %v842 = vsub.f32 1.5, %v841
        %v843 = vmul.f32 %v838, %v842
        %vm844 = vweird.f32 %v780
        %vm845 = vweird.f32 %v838
        %vm846 = vmor %vm844, %vm845
        %v847 = vsel %vm846, %v838, %v843
        %v848 = vrsqrt.pop %v783
        %v849 = vmul.f32 %v848, %v783
        %v850 = vmul.f32 %v849, %v848
        %v851 = vmul.f32 0.5, %v850
        %v852 = vsub.f32 1.5, %v851
        %v853 = vmul.f32 %v848, %v852
        %vm854 = vweird.f32 %v783
        %vm855 = vweird.f32 %v848
        %vm856 = vmor %vm854, %vm855
        %v857 = vsel %vm856, %v848, %v853
        %v858 = vrsqrt.pop %v786
        %v859 = vmul.f32 %v858, %v786
        %v860 = vmul.f32 %v859, %v858
        %v861 = vmul.f32 0.5, %v860
        %v862 = vsub.f32 1.5, %v861
        %v863 = vmul.f32 %v858, %v862
        %vm864 = vweird.f32 %v786
        %vm865 = vweird.f32 %v858
        %vm866 = vmor %vm864, %vm865
        %v867 = vsel %vm866, %v858, %v863
        %v868 = vmul.f32 %v708, %v797
        %v869 = vmul.f32 %v709, %v807
        %v870 = vmul.f32 %v710, %v817
        %v871 = vmul.f32 %v711, %v827
        %v872 = vmul.f32 %v712, %v837
        %v873 = vmul.f32 %v713, %v847
        %v874 = vmul.f32 %v714, %v857
        %v875 = vmul.f32 %v715, %v867
        %v876 = vmul.f32 %v868, %v525
        %v877 = vmul.f32 %v869, %v526
        %v878 = vmul.f32 %v870, %v527
        %v879 = vmul.f32 %v871, %v528
        %v880 = vmul.f32 %v872, %v529
        %v881 = vmul.f32 %v873, %v530
        %v882 = vmul.f32 %v874, %v531
        %v883 = vmul.f32 %v875, %v532
        %v884 = vadd.f32 %v876, %v533
        %v885 = vadd.f32 %v877, %v534
        %v886 = vadd.f32 %v878, %v535
        %v887 = vadd.f32 %v879, %v536
        %v888 = vadd.f32 %v880, %v537
        %v889 = vadd.f32 %v881, %v538
        %v890 = vadd.f32 %v882, %v539
        %v891 = vadd.f32 %v883, %v540
        %v893 = vsel %vm614, %v541, 0
        %v896 = vsel %vm614, %v542, 0
        %v899 = vsel %vm614, %v543, 0
        %v902 = vsel %vm614, %v544, 0
        %v905 = vsel %vm614, %v545, 0
        %v908 = vsel %vm614, %v546, 0
        %v911 = vsel %vm614, %v547, 0
        %v914 = vsel %vm614, %v548, 0
        %916 = vmatpush.msra.mxu0 0.0
        %917 = vmatpush.msra.mxu0 0.0
        %918 = vmatpush.msra.mxu0 0.0
        %919 = vmatpush.msra.mxu0 0.0
        %920 = vmatpush.msra.mxu0 0.0
        %921 = vmatpush.msra.mxu0 0.0
        %922 = vmatpush.msra.mxu0 0.0
        %923 = vmatpush.msra.mxu0 0.0
        %924 = vmatpush.msra.mxu0 %v891
        %925 = vmatpush.msra.mxu0 %v890
        %926 = vmatpush.msra.mxu0 %v889
        %927 = vmatpush.msra.mxu0 %v888
        %928 = vmatpush.msra.mxu0 %v887
        %929 = vmatpush.msra.mxu0 %v886
        %930 = vmatpush.msra.mxu0 %v885
        %931 = vmatpush.msra.mxu0 %v884
        %932 = vmatmul.f32.gmra.mxu0 %v893
        %v933 = vpop.f32.mrf.mxu0
        %v934 = vadd.f32 %v549, %v933
        %935 = vmatmul.f32.gmra.mxu0 %v896
        %v936 = vpop.f32.mrf.mxu0
        %v937 = vadd.f32 %v550, %v936
        %938 = vmatmul.f32.gmra.mxu0 %v899
        %v939 = vpop.f32.mrf.mxu0
        %v940 = vadd.f32 %v551, %v939
        %941 = vmatmul.f32.gmra.mxu0 %v902
        %v942 = vpop.f32.mrf.mxu0
        %v943 = vadd.f32 %v552, %v942
        %944 = vmatmul.f32.gmra.mxu0 %v905
        %v945 = vpop.f32.mrf.mxu0
        %v946 = vadd.f32 %v553, %v945
        %947 = vmatmul.f32.gmra.mxu0 %v908
        %v948 = vpop.f32.mrf.mxu0
        %v949 = vadd.f32 %v554, %v948
        %950 = vmatmul.f32.gmra.mxu0 %v911
        %v951 = vpop.f32.mrf.mxu0
        %v952 = vadd.f32 %v555, %v951
        %953 = vmatmul.f32.gmra.mxu0 %v914
        %v954 = vpop.f32.mrf.mxu0
        %v955 = vadd.f32 %v556, %v954
        %956 = vdwg.mxu0
        %v957 = vmax.f32 %v934, 0.0
        %v958 = vmax.f32 %v937, 0.0
        %v959 = vmax.f32 %v940, 0.0
        %v960 = vmax.f32 %v943, 0.0
        %v961 = vmax.f32 %v946, 0.0
        %v962 = vmax.f32 %v949, 0.0
        %v963 = vmax.f32 %v952, 0.0
        %v964 = vmax.f32 %v955, 0.0
        %965 = vmatpush.msra.mxu0 0.0
        %966 = vmatpush.msra.mxu0 0.0
        %967 = vmatpush.msra.mxu0 0.0
        %968 = vmatpush.msra.mxu0 0.0
        %969 = vmatpush.msra.mxu0 0.0
        %970 = vmatpush.msra.mxu0 0.0
        %971 = vmatpush.msra.mxu0 0.0
        %972 = vmatpush.msra.mxu0 0.0
        %973 = vmatpush.msra.mxu0 %v964
        %974 = vmatpush.msra.mxu0 %v963
        %975 = vmatpush.msra.mxu0 %v962
        %976 = vmatpush.msra.mxu0 %v961
        %977 = vmatpush.msra.mxu0 %v960
        %978 = vmatpush.msra.mxu0 %v959
        %979 = vmatpush.msra.mxu0 %v958
        %980 = vmatpush.msra.mxu0 %v957
        %981 = vmatmul.f32.gmra.mxu0 %v616
        %v982 = vpop.f32.mrf.mxu0
        %v983 = vadd.f32 0.0, %v982
        %984 = vdwg.mxu0
        %v986 = vsel %vm663, %v983, 0
        %988 = vmatpush.msra.mxu0 0.0
        %989 = vmatpush.msra.mxu0 0.0
        %990 = vmatpush.msra.mxu0 0.0
        %991 = vmatpush.msra.mxu0 0.0
        %992 = vmatpush.msra.mxu0 0.0
        %993 = vmatpush.msra.mxu0 0.0
        %994 = vmatpush.msra.mxu0 0.0
        %995 = vmatpush.msra.mxu0 0.0
        %996 = vmatpush.msra.mxu0 0.0
        %997 = vmatpush.msra.mxu0 0.0
        %998 = vmatpush.msra.mxu0 0.0
        %999 = vmatpush.msra.mxu0 0.0
        %1000 = vmatpush.msra.mxu0 0.0
        %1001 = vmatpush.msra.mxu0 0.0
        %1002 = vmatpush.msra.mxu0 0.0
        %1003 = vmatpush.msra.mxu0 %v986
        %1004 = vmatmul.f32.gmra.mxu0 %v640
        %v1005 = vpop.f32.mrf.mxu0
        %v1006 = vadd.f32 0.0, %v1005
        %1007 = vmatmul.f32.gmra.mxu0 %v643
        %v1008 = vpop.f32.mrf.mxu0
        %v1009 = vadd.f32 0.0, %v1008
        %1010 = vmatmul.f32.gmra.mxu0 %v646
        %v1011 = vpop.f32.mrf.mxu0
        %v1012 = vadd.f32 0.0, %v1011
        %1013 = vmatmul.f32.gmra.mxu0 %v649
        %v1014 = vpop.f32.mrf.mxu0
        %v1015 = vadd.f32 0.0, %v1014
        %1016 = vmatmul.f32.gmra.mxu0 %v652
        %v1017 = vpop.f32.mrf.mxu0
        %v1018 = vadd.f32 0.0, %v1017
        %1019 = vmatmul.f32.gmra.mxu0 %v655
        %v1020 = vpop.f32.mrf.mxu0
        %v1021 = vadd.f32 0.0, %v1020
        %1022 = vmatmul.f32.gmra.mxu0 %v658
        %v1023 = vpop.f32.mrf.mxu0
        %v1024 = vadd.f32 0.0, %v1023
        %1025 = vmatmul.f32.gmra.mxu0 %v661
        %v1026 = vpop.f32.mrf.mxu0
        %v1027 = vadd.f32 0.0, %v1026
        %1028 = vdwg.mxu0
        %v1029 = vsub.f32 %v957, %v1006
        %v1030 = vsub.f32 %v958, %v1009
        %v1031 = vsub.f32 %v959, %v1012
        %v1032 = vsub.f32 %v960, %v1015
        %v1033 = vsub.f32 %v961, %v1018
        %v1034 = vsub.f32 %v962, %v1021
        %v1035 = vsub.f32 %v963, %v1024
        %v1036 = vsub.f32 %v964, %v1027
        %v1037 = vmul.f32 %v1029, %v1029
        %v1038 = vmul.f32 %v1030, %v1030
        %v1039 = vmul.f32 %v1031, %v1031
        %v1040 = vmul.f32 %v1032, %v1032
        %v1041 = vmul.f32 %v1033, %v1033
        %v1042 = vmul.f32 %v1034, %v1034
        %v1043 = vmul.f32 %v1035, %v1035
        %v1044 = vmul.f32 %v1036, %v1036
        %1045 = vmatpush.msra.mxu0 0.0
        %1046 = vmatpush.msra.mxu0 0.0
        %1047 = vmatpush.msra.mxu0 0.0
        %1048 = vmatpush.msra.mxu0 0.0
        %1049 = vmatpush.msra.mxu0 0.0
        %1050 = vmatpush.msra.mxu0 0.0
        %1051 = vmatpush.msra.mxu0 0.0
        %1052 = vmatpush.msra.mxu0 0.0
        %1053 = vmatpush.msra.mxu0 %v1044
        %1054 = vmatpush.msra.mxu0 %v1043
        %1055 = vmatpush.msra.mxu0 %v1042
        %1056 = vmatpush.msra.mxu0 %v1041
        %1057 = vmatpush.msra.mxu0 %v1040
        %1058 = vmatpush.msra.mxu0 %v1039
        %1059 = vmatpush.msra.mxu0 %v1038
        %1060 = vmatpush.msra.mxu0 %v1037
        %1061 = vmatmul.f32.gmra.mxu0 %v616
        %v1062 = vpop.f32.mrf.mxu0
        %v1063 = vadd.f32 0.0, %v1062
        %1064 = vdwg.mxu0
        %v1066 = vsel %vm663, %v1063, 0
        %1068 = vmatpush.msra.mxu0 0.0
        %1069 = vmatpush.msra.mxu0 0.0
        %1070 = vmatpush.msra.mxu0 0.0
        %1071 = vmatpush.msra.mxu0 0.0
        %1072 = vmatpush.msra.mxu0 0.0
        %1073 = vmatpush.msra.mxu0 0.0
        %1074 = vmatpush.msra.mxu0 0.0
        %1075 = vmatpush.msra.mxu0 0.0
        %1076 = vmatpush.msra.mxu0 0.0
        %1077 = vmatpush.msra.mxu0 0.0
        %1078 = vmatpush.msra.mxu0 0.0
        %1079 = vmatpush.msra.mxu0 0.0
        %1080 = vmatpush.msra.mxu0 0.0
        %1081 = vmatpush.msra.mxu0 0.0
        %1082 = vmatpush.msra.mxu0 0.0
        %1083 = vmatpush.msra.mxu0 %v1066
        %1084 = vmatmul.f32.gmra.mxu0 %v640
        %v1085 = vpop.f32.mrf.mxu0
        %v1086 = vadd.f32 1e-05, %v1085
        %1087 = vmatmul.f32.gmra.mxu0 %v643
        %v1088 = vpop.f32.mrf.mxu0
        %v1089 = vadd.f32 1e-05, %v1088
        %1090 = vmatmul.f32.gmra.mxu0 %v646
        %v1091 = vpop.f32.mrf.mxu0
        %v1092 = vadd.f32 1e-05, %v1091
        %1093 = vmatmul.f32.gmra.mxu0 %v649
        %v1094 = vpop.f32.mrf.mxu0
        %v1095 = vadd.f32 1e-05, %v1094
        %1096 = vmatmul.f32.gmra.mxu0 %v652
        %v1097 = vpop.f32.mrf.mxu0
        %v1098 = vadd.f32 1e-05, %v1097
        %1099 = vmatmul.f32.gmra.mxu0 %v655
        %v1100 = vpop.f32.mrf.mxu0
        %v1101 = vadd.f32 1e-05, %v1100
        %1102 = vmatmul.f32.gmra.mxu0 %v658
        %v1103 = vpop.f32.mrf.mxu0
        %v1104 = vadd.f32 1e-05, %v1103
        %1105 = vmatmul.f32.gmra.mxu0 %v661
        %v1106 = vpop.f32.mrf.mxu0
        %v1107 = vadd.f32 1e-05, %v1106
        %1108 = vdwg.mxu0
        %v1109 = vrsqrt.pop %v1086
        %v1110 = vmul.f32 %v1109, %v1086
        %v1111 = vmul.f32 %v1110, %v1109
        %v1112 = vmul.f32 0.5, %v1111
        %v1113 = vsub.f32 1.5, %v1112
        %v1114 = vmul.f32 %v1109, %v1113
        %vm1115 = vweird.f32 %v1086
        %vm1116 = vweird.f32 %v1109
        %vm1117 = vmor %vm1115, %vm1116
        %v1118 = vsel %vm1117, %v1109, %v1114
        %v1119 = vrsqrt.pop %v1089
        %v1120 = vmul.f32 %v1119, %v1089
        %v1121 = vmul.f32 %v1120, %v1119
        %v1122 = vmul.f32 0.5, %v1121
        %v1123 = vsub.f32 1.5, %v1122
        %v1124 = vmul.f32 %v1119, %v1123
        %vm1125 = vweird.f32 %v1089
        %vm1126 = vweird.f32 %v1119
        %vm1127 = vmor %vm1125, %vm1126
        %v1128 = vsel %vm1127, %v1119, %v1124
        %v1129 = vrsqrt.pop %v1092
        %v1130 = vmul.f32 %v1129, %v1092
        %v1131 = vmul.f32 %v1130, %v1129
        %v1132 = vmul.f32 0.5, %v1131
        %v1133 = vsub.f32 1.5, %v1132
        %v1134 = vmul.f32 %v1129, %v1133
        %vm1135 = vweird.f32 %v1092
        %vm1136 = vweird.f32 %v1129
        %vm1137 = vmor %vm1135, %vm1136
        %v1138 = vsel %vm1137, %v1129, %v1134
        %v1139 = vrsqrt.pop %v1095
        %v1140 = vmul.f32 %v1139, %v1095
        %v1141 = vmul.f32 %v1140, %v1139
        %v1142 = vmul.f32 0.5, %v1141
        %v1143 = vsub.f32 1.5, %v1142
        %v1144 = vmul.f32 %v1139, %v1143
        %vm1145 = vweird.f32 %v1095
        %vm1146 = vweird.f32 %v1139
        %vm1147 = vmor %vm1145, %vm1146
        %v1148 = vsel %vm1147, %v1139, %v1144
        %v1149 = vrsqrt.pop %v1098
        %v1150 = vmul.f32 %v1149, %v1098
        %v1151 = vmul.f32 %v1150, %v1149
        %v1152 = vmul.f32 0.5, %v1151
        %v1153 = vsub.f32 1.5, %v1152
        %v1154 = vmul.f32 %v1149, %v1153
        %vm1155 = vweird.f32 %v1098
        %vm1156 = vweird.f32 %v1149
        %vm1157 = vmor %vm1155, %vm1156
        %v1158 = vsel %vm1157, %v1149, %v1154
        %v1159 = vrsqrt.pop %v1101
        %v1160 = vmul.f32 %v1159, %v1101
        %v1161 = vmul.f32 %v1160, %v1159
        %v1162 = vmul.f32 0.5, %v1161
        %v1163 = vsub.f32 1.5, %v1162
        %v1164 = vmul.f32 %v1159, %v1163
        %vm1165 = vweird.f32 %v1101
        %vm1166 = vweird.f32 %v1159
        %vm1167 = vmor %vm1165, %vm1166
        %v1168 = vsel %vm1167, %v1159, %v1164
        %v1169 = vrsqrt.pop %v1104
        %v1170 = vmul.f32 %v1169, %v1104
        %v1171 = vmul.f32 %v1170, %v1169
        %v1172 = vmul.f32 0.5, %v1171
        %v1173 = vsub.f32 1.5, %v1172
        %v1174 = vmul.f32 %v1169, %v1173
        %vm1175 = vweird.f32 %v1104
        %vm1176 = vweird.f32 %v1169
        %vm1177 = vmor %vm1175, %vm1176
        %v1178 = vsel %vm1177, %v1169, %v1174
        %v1179 = vrsqrt.pop %v1107
        %v1180 = vmul.f32 %v1179, %v1107
        %v1181 = vmul.f32 %v1180, %v1179
        %v1182 = vmul.f32 0.5, %v1181
        %v1183 = vsub.f32 1.5, %v1182
        %v1184 = vmul.f32 %v1179, %v1183
        %vm1185 = vweird.f32 %v1107
        %vm1186 = vweird.f32 %v1179
        %vm1187 = vmor %vm1185, %vm1186
        %v1188 = vsel %vm1187, %v1179, %v1184
        %v1189 = vmul.f32 %v1029, %v1118
        %v1190 = vmul.f32 %v1030, %v1128
        %v1191 = vmul.f32 %v1031, %v1138
        %v1192 = vmul.f32 %v1032, %v1148
        %v1193 = vmul.f32 %v1033, %v1158
        %v1194 = vmul.f32 %v1034, %v1168
        %v1195 = vmul.f32 %v1035, %v1178
        %v1196 = vmul.f32 %v1036, %v1188
        %v1197 = vmul.f32 %v1189, %v557
        %v1198 = vmul.f32 %v1190, %v558
        %v1199 = vmul.f32 %v1191, %v559
        %v1200 = vmul.f32 %v1192, %v560
        %v1201 = vmul.f32 %v1193, %v561
        %v1202 = vmul.f32 %v1194, %v562
        %v1203 = vmul.f32 %v1195, %v563
        %v1204 = vmul.f32 %v1196, %v564
        %v1205 = vadd.f32 %v1197, %v565
        %v1206 = vadd.f32 %v1198, %v566
        %v1207 = vadd.f32 %v1199, %v567
        %v1208 = vadd.f32 %v1200, %v568
        %v1209 = vadd.f32 %v1201, %v569
        %v1210 = vadd.f32 %v1202, %v570
        %v1211 = vadd.f32 %v1203, %v571
        %v1212 = vadd.f32 %v1204, %v572
        %v1214 = vsel %vm614, %v573, 0
        %v1217 = vsel %vm614, %v574, 0
        %v1220 = vsel %vm614, %v575, 0
        %v1223 = vsel %vm614, %v576, 0
        %v1226 = vsel %vm614, %v577, 0
        %v1229 = vsel %vm614, %v578, 0
        %v1232 = vsel %vm614, %v579, 0
        %v1235 = vsel %vm614, %v580, 0
        %1237 = vmatpush.msra.mxu0 0.0
        %1238 = vmatpush.msra.mxu0 0.0
        %1239 = vmatpush.msra.mxu0 0.0
        %1240 = vmatpush.msra.mxu0 0.0
        %1241 = vmatpush.msra.mxu0 0.0
        %1242 = vmatpush.msra.mxu0 0.0
        %1243 = vmatpush.msra.mxu0 0.0
        %1244 = vmatpush.msra.mxu0 0.0
        %1245 = vmatpush.msra.mxu0 %v1212
        %1246 = vmatpush.msra.mxu0 %v1211
        %1247 = vmatpush.msra.mxu0 %v1210
        %1248 = vmatpush.msra.mxu0 %v1209
        %1249 = vmatpush.msra.mxu0 %v1208
        %1250 = vmatpush.msra.mxu0 %v1207
        %1251 = vmatpush.msra.mxu0 %v1206
        %1252 = vmatpush.msra.mxu0 %v1205
        %1253 = vmatmul.f32.gmra.mxu0 %v1214
        %v1254 = vpop.f32.mrf.mxu0
        %v1255 = vadd.f32 %v581, %v1254
        %1256 = vmatmul.f32.gmra.mxu0 %v1217
        %v1257 = vpop.f32.mrf.mxu0
        %v1258 = vadd.f32 %v582, %v1257
        %1259 = vmatmul.f32.gmra.mxu0 %v1220
        %v1260 = vpop.f32.mrf.mxu0
        %v1261 = vadd.f32 %v583, %v1260
        %1262 = vmatmul.f32.gmra.mxu0 %v1223
        %v1263 = vpop.f32.mrf.mxu0
        %v1264 = vadd.f32 %v584, %v1263
        %1265 = vmatmul.f32.gmra.mxu0 %v1226
        %v1266 = vpop.f32.mrf.mxu0
        %v1267 = vadd.f32 %v585, %v1266
        %1268 = vmatmul.f32.gmra.mxu0 %v1229
        %v1269 = vpop.f32.mrf.mxu0
        %v1270 = vadd.f32 %v586, %v1269
        %1271 = vmatmul.f32.gmra.mxu0 %v1232
        %v1272 = vpop.f32.mrf.mxu0
        %v1273 = vadd.f32 %v587, %v1272
        %1274 = vmatmul.f32.gmra.mxu0 %v1235
        %v1275 = vpop.f32.mrf.mxu0
        %v1276 = vadd.f32 %v588, %v1275
        %1277 = vdwg.mxu0
        %1279 = vset.pattern.permute.xlu0 0
        %1280 = vperm.xlu0 %1279, %v1255
        %v1281 = vpop.permute.xlu0 %1280
        %1284 = vset.pattern.permute.xlu0 0
        %1285 = vperm.xlu0 %1284, %v1258
        %v1286 = vpop.permute.xlu0 %1285
        %1289 = vset.pattern.permute.xlu0 0
        %1290 = vperm.xlu0 %1289, %v1261
        %v1291 = vpop.permute.xlu0 %1290
        %1294 = vset.pattern.permute.xlu0 0
        %1295 = vperm.xlu0 %1294, %v1264
        %v1296 = vpop.permute.xlu0 %1295
        %1299 = vset.pattern.permute.xlu0 0
        %1300 = vperm.xlu0 %1299, %v1267
        %v1301 = vpop.permute.xlu0 %1300
        %1304 = vset.pattern.permute.xlu0 0
        %1305 = vperm.xlu0 %1304, %v1270
        %v1306 = vpop.permute.xlu0 %1305
        %1309 = vset.pattern.permute.xlu0 0
        %1310 = vperm.xlu0 %1309, %v1273
        %v1311 = vpop.permute.xlu0 %1310
        %1314 = vset.pattern.permute.xlu0 0
        %1315 = vperm.xlu0 %1314, %v1276
        %v1316 = vpop.permute.xlu0 %1315
        %v1318 = vadd.f32 %v461, %v1281
        %v1319 = vadd.f32 %v462, %v1281
        %v1320 = vadd.f32 %v463, %v1286
        %v1321 = vadd.f32 %v464, %v1286
        %v1322 = vadd.f32 %v465, %v1291
        %v1323 = vadd.f32 %v466, %v1291
        %v1324 = vadd.f32 %v467, %v1296
        %v1325 = vadd.f32 %v468, %v1296
        %v1326 = vadd.f32 %v469, %v1301
        %v1327 = vadd.f32 %v470, %v1301
        %v1328 = vadd.f32 %v471, %v1306
        %v1329 = vadd.f32 %v472, %v1306
        %v1330 = vadd.f32 %v473, %v1311
        %v1331 = vadd.f32 %v474, %v1311
        %v1332 = vadd.f32 %v475, %v1316
        %v1333 = vadd.f32 %v476, %v1316
        %1334 = vst [vmem:[%s460] sm:$0xff] %v1318
        %1335 = vst [vmem:[%s460 + $0x8] sm:$0xff] %v1319
        %1336 = vst [vmem:[%s460 + $0x10] sm:$0xff] %v1320
        %1337 = vst [vmem:[%s460 + $0x18] sm:$0xff] %v1321
        %1338 = vst [vmem:[%s460 + $0x20] sm:$0xff] %v1322
        %1339 = vst [vmem:[%s460 + $0x28] sm:$0xff] %v1323
        %1340 = vst [vmem:[%s460 + $0x30] sm:$0xff] %v1324
        %1341 = vst [vmem:[%s460 + $0x38] sm:$0xff] %v1325
        %1342 = vst [vmem:[%s460 + $0x40] sm:$0xff] %v1326
        %1343 = vst [vmem:[%s460 + $0x48] sm:$0xff] %v1327
        %1344 = vst [vmem:[%s460 + $0x50] sm:$0xff] %v1328
        %1345 = vst [vmem:[%s460 + $0x58] sm:$0xff] %v1329
        %1346 = vst [vmem:[%s460 + $0x60] sm:$0xff] %v1330
        %1347 = vst [vmem:[%s460 + $0x68] sm:$0xff] %v1331
        %1348 = vst [vmem:[%s460 + $0x70] sm:$0xff] %v1332
        %1349 = vst [vmem:[%s460 + $0x78] sm:$0xff] %v1333
        %s1350 = sand.u32 %s316, 1
        %s1351 = scalar_lea.sflag [#allocation4], %s1350
        %s1352 = sand.u32 %s316, 1
        %s1353 = smul.addr %s1352, 128
        %s1354 = scalar_lea.vmem [#allocation5], %s1353
        // Predicated region
        $region77: #{tpu_custom_call.1} parent=71 // pred_check
          %p1355 = pneg %p326
        $region78: #{tpu_custom_call.1} parent=71 // pred_check_branch
          %1357 = sbr.rel (%p1355) target = $region80
        $region79: #{tpu_custom_call.1} parent=71 // pred_region
          %1359 = vsyncadd %s1351, 0
          %s1360 = smul.addr %s30, 16
          %s1361 = smul.addr %s1360, 8
          %s1362 = scalar_lea.hbm %s13, %s1361
          %s1363 = sshll.u32 %s1354, 4
          %s1364 = int_to_ptr.vmem [resolvable:$true] %s1363
          %s1365 = sshll.u32 %s1362, 4
          %s1366 = int_to_ptr.hbm [resolvable:$true] %s1365
          %1371 = dma.vmem_to_hbm [thread:$0]  %s1364, 2048, %s1366, %s1351, 256, 256, 16
        $region80: #{tpu_custom_call.1} parent=71 // pred_fallthru
          _
      $region72: #{tpu_custom_call.1} parent=5 // pred_fallthru
        _
      %p1372 = scmp.le.s32.totalorder 2, %s25
      // Predicated region
      $region81: #{tpu_custom_call.1} parent=5 // pred_check
        %p1373 = pneg %p1372
      $region82: #{tpu_custom_call.1} parent=5 // pred_check_branch
        %1375 = sbr.rel (%p1373) target = $region84
      $region83: #{tpu_custom_call.1} parent=5 // pred_region
        %s1376 = ssub.s32 %s25, 2
        // Predicated region
        $region85: #{tpu_custom_call.1} parent=83 // pred_check
          %p1377 = pneg %p332
        $region86: #{tpu_custom_call.1} parent=83 // pred_check_branch
          %1379 = sbr.rel (%p1377) target = $region88
        $region87: #{tpu_custom_call.1} parent=83 // pred_region
          %s1380 = sand.u32 %s317, 1
          %s1381 = scalar_lea.sflag [#allocation4], %s1380
          %s1382 = sand.u32 %s317, 1
          %s1383 = smul.addr %s1382, 128
          %s1384 = scalar_lea.vmem [#allocation5], %s1383
          %1386 = dma.done %s1381, 2048
        $region88: #{tpu_custom_call.1} parent=83 // pred_fallthru
          _
      $region84: #{tpu_custom_call.1} parent=5 // pred_fallthru
        _
    $region6: #{tpu_custom_call.1} parent=1 // loop_footer
      %s29 = sadd.s32 1, %s25
    $region7: #{tpu_custom_call.1} parent=1 // loop_footer_branch
      %24 = sbr.rel target = $region3
    $region8: #{tpu_custom_call.1} parent=1 // loop_exit
      _
    %1387 = vsyncpa [#allocation3], 1
    %s1388 = scalar_lea.sflag [#allocation3], 1
    %1389 = vsyncpa %s1388, 1
    %1390 = vsyncpa [#allocation4], 1
    %s1391 = scalar_lea.sflag [#allocation4], 1
    %1392 = vsyncpa %s1391, 1

</llo_original>
